<compile_context>
chip_gen: v7x
topology: tpu7x:2x2x1
jax: 0.10.0
libtpu: 0.0.40
codegen_flags: <defaults>
</compile_context>

<pallas_src>
import math

import jax
import jax.numpy as jnp
import numpy as np
from jax.experimental import pallas as pl
from jax.experimental.pallas import tpu as pltpu

# Small Informer-style config.
B = 2          # batch
L = 8          # query sequence length
S = 8          # key/value sequence length
D = 32         # d_model
H = 4          # heads
DH = D // H    # head dim


def attention_layer_kernel(q_ref, k_ref, v_ref, w_ref, b_ref, o_ref):
    """Fused AttentionLayer forward for one batch element (grid step).

    q_ref : (1, L, D)   queries for this batch
    k_ref : (1, S, D)   keys for this batch
    v_ref : (1, S, D)   values for this batch
    w_ref : (D, 4D)     [Wq*scale | Wk | Wv | Wo]   (pre-fused, lane-dense)
    b_ref : (1, 4D)     [bq*scale | bk | bv | bo]
    o_ref : (1, L, D)   output tokens for this batch
    """
    # Per-input projections against static column slices of the fused slab
    # (no wasted [Wq|Wk|Wv] columns per token). Wq / bq carry the pre-folded
    # 1/sqrt(DH) scale, so no per-score multiply below.
    q = jnp.dot(q_ref[0], w_ref[:, 0:D],
                preferred_element_type=jnp.float32) + b_ref[:, 0:D]
    k = jnp.dot(k_ref[0], w_ref[:, D:2 * D],
                preferred_element_type=jnp.float32) + b_ref[:, D:2 * D]
    v = jnp.dot(v_ref[0], w_ref[:, 2 * D:3 * D],
                preferred_element_type=jnp.float32) + b_ref[:, 2 * D:3 * D]

    # One transpose for all heads (hoisted out of the head loop).
    k_t = k.T                                                    # (D, S)

    ctx_heads = []
    for h in range(H):
        cs = slice(h * DH, (h + 1) * DH)
        # scores (L, S): standard last-dim x first-dim contraction.
        s = jnp.dot(q[:, cs], k_t[cs, :],
                    preferred_element_type=jnp.float32)
        s = s - jnp.max(s, axis=-1, keepdims=True)
        p = jnp.exp(s)
        # Softmax denominator on the (otherwise idle) EUP slot.
        p = p * pl.reciprocal(jnp.sum(p, axis=-1, keepdims=True), approx=True)
        ctx_heads.append(jnp.dot(p, v[:, cs],
                                 preferred_element_type=jnp.float32))

    # Merge heads as values (lane-axis concat) -> single Wo matmul; no VMEM
    # scratch round-trip between attention and the output projection.
    ctx = jnp.concatenate(ctx_heads, axis=-1)                    # (L, D)
    o_ref[0] = jnp.dot(ctx, w_ref[:, 3 * D:4 * D],
                       preferred_element_type=jnp.float32) + b_ref[:, 3 * D:]


@jax.jit
def attention_layer(queries, keys, values, w_slab, b_slab):
    """Pallas forward. queries: (B, L, D); keys/values: (B, S, D)."""
    return pl.pallas_call(
        attention_layer_kernel,
        out_shape=jax.ShapeDtypeStruct((B, L, D), jnp.float32),
        grid=(B,),   # one batch element per step; both TCs used on v7x
        in_specs=[pl.BlockSpec((1, L, D), lambda b: (b, 0, 0)),
                  pl.BlockSpec((1, S, D), lambda b: (b, 0, 0)),
                  pl.BlockSpec((1, S, D), lambda b: (b, 0, 0)),
                  pl.BlockSpec((D, 4 * D), lambda b: (0, 0)),
                  pl.BlockSpec((1, 4 * D), lambda b: (0, 0))],
        out_specs=pl.BlockSpec((1, L, D), lambda b: (b, 0, 0)),
        compiler_params=pltpu.CompilerParams(
            dimension_semantics=("parallel",)),
    )(queries, keys, values, w_slab, b_slab)


# ------------------------- parameter construction ---------------------------
def init_params(key):
    ks = jax.random.split(key, 8)

    def w(k, shape):
        return jax.random.normal(k, shape, jnp.float32) * 0.05

    wq, bq = w(ks[0], (D, D)), w(ks[1], (1, D))
    wk, bk = w(ks[2], (D, D)), w(ks[3], (1, D))
    wv, bv = w(ks[4], (D, D)), w(ks[5], (1, D))
    wo, bo = w(ks[6], (D, D)), w(ks[7], (1, D))
    return (wq, bq, wk, bk, wv, bv, wo, bo)


def fuse_params(params):
    """Init-time fusion: one (D,4D) weight slab + (1,4D) bias slab, with the
    1/sqrt(DH) attention scale folded into the query projection."""
    wq, bq, wk, bk, wv, bv, wo, bo = params
    scale = 1.0 / math.sqrt(DH)
    w_slab = jnp.concatenate([wq * scale, wk, wv, wo], axis=1)   # (D, 4D)
    b_slab = jnp.concatenate([bq * scale, bk, bv, bo], axis=1)   # (1, 4D)
    return w_slab, b_slab


# ---------------- pure-JAX reference (same math, no Pallas) -----------------
def ref_attention_layer(queries, keys, values, params):
    wq, bq, wk, bk, wv, bv, wo, bo = params
    q = (queries @ wq + bq).reshape(B, L, H, DH)
    k = (keys @ wk + bk).reshape(B, S, H, DH)
    v = (values @ wv + bv).reshape(B, S, H, DH)
    s = jnp.einsum("blhd,bshd->bhls", q, k) / math.sqrt(DH)
    p = jax.nn.softmax(s, axis=-1)
    o = jnp.einsum("bhls,bshd->blhd", p, v).reshape(B, L, D)
    return o @ wo + bo


if __name__ == "__main__":
    key = jax.random.PRNGKey(0)
    kq, kk, kv, kp = jax.random.split(key, 4)
    queries = jax.random.normal(kq, (B, L, D), jnp.float32)
    keys = jax.random.normal(kk, (B, S, D), jnp.float32)
    values = jax.random.normal(kv, (B, S, D), jnp.float32)
    params = init_params(kp)
    w_slab, b_slab = fuse_params(params)   # done once at init, not per call

    out = attention_layer(queries, keys, values, w_slab, b_slab)
    out = jax.block_until_ready(out)

    ref = ref_attention_layer(queries, keys, values, params)
    # Slightly looser than 1e-3 to allow for the approx (EUP) reciprocal in
    # the softmax denominator.
    np.testing.assert_allclose(np.asarray(out), np.asarray(ref),
                               atol=2e-3, rtol=2e-3)
    print("KERNEL_OK")
</pallas_src>

<mosaic_0001>
module attributes {stable_mosaic.version = 11 : i64} {
  func.func @attention_layer_kernel(%arg0: i32, %arg1: memref<1x8x32xf32, #tpu.memory_space<vmem>>, %arg2: memref<1x8x32xf32, #tpu.memory_space<vmem>>, %arg3: memref<1x8x32xf32, #tpu.memory_space<vmem>>, %arg4: memref<32x128xf32, #tpu.memory_space<vmem>>, %arg5: memref<1x128xf32, #tpu.memory_space<vmem>>, %arg6: memref<1x8x32xf32, #tpu.memory_space<vmem>>) attributes {dimension_semantics = [#tpu.dimension_semantics<parallel>], iteration_bounds = array<i64: 2>, scalar_prefetch = 0 : i64, scratch_operands = 0 : i64, tpu.core_type = #tpu.core_type<tc>, window_params = [{transform_indices = @transform_0, window_bounds = array<i64: 1, 8, 32>}, {transform_indices = @transform_1, window_bounds = array<i64: 1, 8, 32>}, {transform_indices = @transform_2, window_bounds = array<i64: 1, 8, 32>}, {pipeline_mode = #tpu.pipeline_mode<synchronous>, transform_indices = @transform_3, window_bounds = array<i64: 32, 128>}, {pipeline_mode = #tpu.pipeline_mode<synchronous>, transform_indices = @transform_4, window_bounds = array<i64: 1, 128>}, {transform_indices = @transform_5, window_bounds = array<i64: 1, 8, 32>}]} {
    %c0 = arith.constant 0 : index
    %c0_0 = arith.constant 0 : index
    %c0_1 = arith.constant 0 : index
    %0 = vector.load %arg1[%c0, %c0_0, %c0_1] : memref<1x8x32xf32, #tpu.memory_space<vmem>>, vector<1x8x32xf32>
    %1 = vector.shape_cast %0 : vector<1x8x32xf32> to vector<8x32xf32>
    %c0_2 = arith.constant 0 : index
    %c0_3 = arith.constant 0 : index
    %2 = vector.load %arg4[%c0_2, %c0_3] : memref<32x128xf32, #tpu.memory_space<vmem>>, vector<32x32xf32>
    %cst = arith.constant dense<0.000000e+00> : vector<8x32xf32>
    %3 = tpu.matmul %1, %2, %cst {dimension_numbers = #tpu.dot_dimension_numbers<[1], [0], [0], [1], [0, 0, 1, 1], [], []>} : vector<8x32xf32>, vector<32x32xf32>, vector<8x32xf32> -> vector<8x32xf32>
    %c0_4 = arith.constant 0 : index
    %c0_5 = arith.constant 0 : index
    %4 = vector.load %arg5[%c0_4, %c0_5] : memref<1x128xf32, #tpu.memory_space<vmem>>, vector<1x32xf32>
    %5 = vector.broadcast %4 : vector<1x32xf32> to vector<8x32xf32>
    %6 = arith.addf %3, %5 : vector<8x32xf32>
    %c0_6 = arith.constant 0 : index
    %c0_7 = arith.constant 0 : index
    %c0_8 = arith.constant 0 : index
    %7 = vector.load %arg2[%c0_6, %c0_7, %c0_8] : memref<1x8x32xf32, #tpu.memory_space<vmem>>, vector<1x8x32xf32>
    %8 = vector.shape_cast %7 : vector<1x8x32xf32> to vector<8x32xf32>
    %c0_9 = arith.constant 0 : index
    %c32 = arith.constant 32 : index
    %9 = vector.load %arg4[%c0_9, %c32] : memref<32x128xf32, #tpu.memory_space<vmem>>, vector<32x32xf32>
    %cst_10 = arith.constant dense<0.000000e+00> : vector<8x32xf32>
    %10 = tpu.matmul %8, %9, %cst_10 {dimension_numbers = #tpu.dot_dimension_numbers<[1], [0], [0], [1], [0, 0, 1, 1], [], []>} : vector<8x32xf32>, vector<32x32xf32>, vector<8x32xf32> -> vector<8x32xf32>
    %c0_11 = arith.constant 0 : index
    %c32_12 = arith.constant 32 : index
    %11 = vector.load %arg5[%c0_11, %c32_12] : memref<1x128xf32, #tpu.memory_space<vmem>>, vector<1x32xf32>
    %12 = vector.broadcast %11 : vector<1x32xf32> to vector<8x32xf32>
    %13 = arith.addf %10, %12 : vector<8x32xf32>
    %c0_13 = arith.constant 0 : index
    %c0_14 = arith.constant 0 : index
    %c0_15 = arith.constant 0 : index
    %14 = vector.load %arg3[%c0_13, %c0_14, %c0_15] : memref<1x8x32xf32, #tpu.memory_space<vmem>>, vector<1x8x32xf32>
    %15 = vector.shape_cast %14 : vector<1x8x32xf32> to vector<8x32xf32>
    %c0_16 = arith.constant 0 : index
    %c64 = arith.constant 64 : index
    %16 = vector.load %arg4[%c0_16, %c64] : memref<32x128xf32, #tpu.memory_space<vmem>>, vector<32x32xf32>
    %cst_17 = arith.constant dense<0.000000e+00> : vector<8x32xf32>
    %17 = tpu.matmul %15, %16, %cst_17 {dimension_numbers = #tpu.dot_dimension_numbers<[1], [0], [0], [1], [0, 0, 1, 1], [], []>} : vector<8x32xf32>, vector<32x32xf32>, vector<8x32xf32> -> vector<8x32xf32>
    %c0_18 = arith.constant 0 : index
    %c64_19 = arith.constant 64 : index
    %18 = vector.load %arg5[%c0_18, %c64_19] : memref<1x128xf32, #tpu.memory_space<vmem>>, vector<1x32xf32>
    %19 = vector.broadcast %18 : vector<1x32xf32> to vector<8x32xf32>
    %20 = arith.addf %17, %19 : vector<8x32xf32>
    %21 = tpu.transpose %13, [1, 0] : vector<8x32xf32> -> vector<32x8xf32>
    %22 = vector.extract_strided_slice %6 {offsets = [0, 0], sizes = [8, 8], strides = [1, 1]} : vector<8x32xf32> to vector<8x8xf32>
    %23 = vector.extract_strided_slice %21 {offsets = [0, 0], sizes = [8, 8], strides = [1, 1]} : vector<32x8xf32> to vector<8x8xf32>
    %cst_20 = arith.constant dense<0.000000e+00> : vector<8x8xf32>
    %24 = tpu.matmul %22, %23, %cst_20 {dimension_numbers = #tpu.dot_dimension_numbers<[1], [0], [0], [1], [0, 0, 1, 1], [], []>} : vector<8x8xf32>, vector<8x8xf32>, vector<8x8xf32> -> vector<8x8xf32>
    %cst_21 = arith.constant dense<0xFF800000> : vector<8xf32>
    %25 = vector.multi_reduction <maximumf>, %24, %cst_21 [1] : vector<8x8xf32> to vector<8xf32>
    %26 = vector.shape_cast %25 : vector<8xf32> to vector<8x1xf32>
    %27 = vector.broadcast %26 : vector<8x1xf32> to vector<8x8xf32>
    %28 = arith.subf %24, %27 : vector<8x8xf32>
    %29 = math.exp %28 : vector<8x8xf32>
    %cst_22 = arith.constant dense<0.000000e+00> : vector<8xf32>
    %30 = vector.multi_reduction <add>, %29, %cst_22 [1] : vector<8x8xf32> to vector<8xf32>
    %31 = vector.shape_cast %30 : vector<8xf32> to vector<8x1xf32>
    %32 = tpu.reciprocal %31 {approx = true} : vector<8x1xf32> -> vector<8x1xf32>
    %33 = vector.broadcast %32 : vector<8x1xf32> to vector<8x8xf32>
    %34 = arith.mulf %29, %33 : vector<8x8xf32>
    %35 = vector.extract_strided_slice %20 {offsets = [0, 0], sizes = [8, 8], strides = [1, 1]} : vector<8x32xf32> to vector<8x8xf32>
    %cst_23 = arith.constant dense<0.000000e+00> : vector<8x8xf32>
    %36 = tpu.matmul %34, %35, %cst_23 {dimension_numbers = #tpu.dot_dimension_numbers<[1], [0], [0], [1], [0, 0, 1, 1], [], []>} : vector<8x8xf32>, vector<8x8xf32>, vector<8x8xf32> -> vector<8x8xf32>
    %37 = vector.extract_strided_slice %6 {offsets = [0, 8], sizes = [8, 8], strides = [1, 1]} : vector<8x32xf32> to vector<8x8xf32>
    %38 = vector.extract_strided_slice %21 {offsets = [8, 0], sizes = [8, 8], strides = [1, 1]} : vector<32x8xf32> to vector<8x8xf32>
    %cst_24 = arith.constant dense<0.000000e+00> : vector<8x8xf32>
    %39 = tpu.matmul %37, %38, %cst_24 {dimension_numbers = #tpu.dot_dimension_numbers<[1], [0], [0], [1], [0, 0, 1, 1], [], []>} : vector<8x8xf32>, vector<8x8xf32>, vector<8x8xf32> -> vector<8x8xf32>
    %cst_25 = arith.constant dense<0xFF800000> : vector<8xf32>
    %40 = vector.multi_reduction <maximumf>, %39, %cst_25 [1] : vector<8x8xf32> to vector<8xf32>
    %41 = vector.shape_cast %40 : vector<8xf32> to vector<8x1xf32>
    %42 = vector.broadcast %41 : vector<8x1xf32> to vector<8x8xf32>
    %43 = arith.subf %39, %42 : vector<8x8xf32>
    %44 = math.exp %43 : vector<8x8xf32>
    %cst_26 = arith.constant dense<0.000000e+00> : vector<8xf32>
    %45 = vector.multi_reduction <add>, %44, %cst_26 [1] : vector<8x8xf32> to vector<8xf32>
    %46 = vector.shape_cast %45 : vector<8xf32> to vector<8x1xf32>
    %47 = tpu.reciprocal %46 {approx = true} : vector<8x1xf32> -> vector<8x1xf32>
    %48 = vector.broadcast %47 : vector<8x1xf32> to vector<8x8xf32>
    %49 = arith.mulf %44, %48 : vector<8x8xf32>
    %50 = vector.extract_strided_slice %20 {offsets = [0, 8], sizes = [8, 8], strides = [1, 1]} : vector<8x32xf32> to vector<8x8xf32>
    %cst_27 = arith.constant dense<0.000000e+00> : vector<8x8xf32>
    %51 = tpu.matmul %49, %50, %cst_27 {dimension_numbers = #tpu.dot_dimension_numbers<[1], [0], [0], [1], [0, 0, 1, 1], [], []>} : vector<8x8xf32>, vector<8x8xf32>, vector<8x8xf32> -> vector<8x8xf32>
    %52 = vector.extract_strided_slice %6 {offsets = [0, 16], sizes = [8, 8], strides = [1, 1]} : vector<8x32xf32> to vector<8x8xf32>
    %53 = vector.extract_strided_slice %21 {offsets = [16, 0], sizes = [8, 8], strides = [1, 1]} : vector<32x8xf32> to vector<8x8xf32>
    %cst_28 = arith.constant dense<0.000000e+00> : vector<8x8xf32>
    %54 = tpu.matmul %52, %53, %cst_28 {dimension_numbers = #tpu.dot_dimension_numbers<[1], [0], [0], [1], [0, 0, 1, 1], [], []>} : vector<8x8xf32>, vector<8x8xf32>, vector<8x8xf32> -> vector<8x8xf32>
    %cst_29 = arith.constant dense<0xFF800000> : vector<8xf32>
    %55 = vector.multi_reduction <maximumf>, %54, %cst_29 [1] : vector<8x8xf32> to vector<8xf32>
    %56 = vector.shape_cast %55 : vector<8xf32> to vector<8x1xf32>
    %57 = vector.broadcast %56 : vector<8x1xf32> to vector<8x8xf32>
    %58 = arith.subf %54, %57 : vector<8x8xf32>
    %59 = math.exp %58 : vector<8x8xf32>
    %cst_30 = arith.constant dense<0.000000e+00> : vector<8xf32>
    %60 = vector.multi_reduction <add>, %59, %cst_30 [1] : vector<8x8xf32> to vector<8xf32>
    %61 = vector.shape_cast %60 : vector<8xf32> to vector<8x1xf32>
    %62 = tpu.reciprocal %61 {approx = true} : vector<8x1xf32> -> vector<8x1xf32>
    %63 = vector.broadcast %62 : vector<8x1xf32> to vector<8x8xf32>
    %64 = arith.mulf %59, %63 : vector<8x8xf32>
    %65 = vector.extract_strided_slice %20 {offsets = [0, 16], sizes = [8, 8], strides = [1, 1]} : vector<8x32xf32> to vector<8x8xf32>
    %cst_31 = arith.constant dense<0.000000e+00> : vector<8x8xf32>
    %66 = tpu.matmul %64, %65, %cst_31 {dimension_numbers = #tpu.dot_dimension_numbers<[1], [0], [0], [1], [0, 0, 1, 1], [], []>} : vector<8x8xf32>, vector<8x8xf32>, vector<8x8xf32> -> vector<8x8xf32>
    %67 = vector.extract_strided_slice %6 {offsets = [0, 24], sizes = [8, 8], strides = [1, 1]} : vector<8x32xf32> to vector<8x8xf32>
    %68 = vector.extract_strided_slice %21 {offsets = [24, 0], sizes = [8, 8], strides = [1, 1]} : vector<32x8xf32> to vector<8x8xf32>
    %cst_32 = arith.constant dense<0.000000e+00> : vector<8x8xf32>
    %69 = tpu.matmul %67, %68, %cst_32 {dimension_numbers = #tpu.dot_dimension_numbers<[1], [0], [0], [1], [0, 0, 1, 1], [], []>} : vector<8x8xf32>, vector<8x8xf32>, vector<8x8xf32> -> vector<8x8xf32>
    %cst_33 = arith.constant dense<0xFF800000> : vector<8xf32>
    %70 = vector.multi_reduction <maximumf>, %69, %cst_33 [1] : vector<8x8xf32> to vector<8xf32>
    %71 = vector.shape_cast %70 : vector<8xf32> to vector<8x1xf32>
    %72 = vector.broadcast %71 : vector<8x1xf32> to vector<8x8xf32>
    %73 = arith.subf %69, %72 : vector<8x8xf32>
    %74 = math.exp %73 : vector<8x8xf32>
    %cst_34 = arith.constant dense<0.000000e+00> : vector<8xf32>
    %75 = vector.multi_reduction <add>, %74, %cst_34 [1] : vector<8x8xf32> to vector<8xf32>
    %76 = vector.shape_cast %75 : vector<8xf32> to vector<8x1xf32>
    %77 = tpu.reciprocal %76 {approx = true} : vector<8x1xf32> -> vector<8x1xf32>
    %78 = vector.broadcast %77 : vector<8x1xf32> to vector<8x8xf32>
    %79 = arith.mulf %74, %78 : vector<8x8xf32>
    %80 = vector.extract_strided_slice %20 {offsets = [0, 24], sizes = [8, 8], strides = [1, 1]} : vector<8x32xf32> to vector<8x8xf32>
    %cst_35 = arith.constant dense<0.000000e+00> : vector<8x8xf32>
    %81 = tpu.matmul %79, %80, %cst_35 {dimension_numbers = #tpu.dot_dimension_numbers<[1], [0], [0], [1], [0, 0, 1, 1], [], []>} : vector<8x8xf32>, vector<8x8xf32>, vector<8x8xf32> -> vector<8x8xf32>
    %82 = tpu.concatenate %36, %51, %66, %81 in 1 : vector<8x8xf32>, vector<8x8xf32>, vector<8x8xf32>, vector<8x8xf32> -> vector<8x32xf32>
    %c0_36 = arith.constant 0 : index
    %c96 = arith.constant 96 : index
    %83 = vector.load %arg4[%c0_36, %c96] : memref<32x128xf32, #tpu.memory_space<vmem>>, vector<32x32xf32>
    %cst_37 = arith.constant dense<0.000000e+00> : vector<8x32xf32>
    %84 = tpu.matmul %82, %83, %cst_37 {dimension_numbers = #tpu.dot_dimension_numbers<[1], [0], [0], [1], [0, 0, 1, 1], [], []>} : vector<8x32xf32>, vector<32x32xf32>, vector<8x32xf32> -> vector<8x32xf32>
    %c0_38 = arith.constant 0 : index
    %c96_39 = arith.constant 96 : index
    %85 = vector.load %arg5[%c0_38, %c96_39] : memref<1x128xf32, #tpu.memory_space<vmem>>, vector<1x32xf32>
    %86 = vector.broadcast %85 : vector<1x32xf32> to vector<8x32xf32>
    %87 = arith.addf %84, %86 : vector<8x32xf32>
    %c0_40 = arith.constant 0 : index
    %c0_41 = arith.constant 0 : index
    %c0_42 = arith.constant 0 : index
    %88 = vector.load %arg6[%c0_40, %c0_41, %c0_42] : memref<1x8x32xf32, #tpu.memory_space<vmem>>, vector<1x8x32xf32>
    %89 = vector.shape_cast %88 : vector<1x8x32xf32> to vector<8x32xf32>
    %90 = vector.shape_cast %87 : vector<8x32xf32> to vector<1x8x32xf32>
    tpu.vector_store %arg6[%c0_40, %c0_41, %c0_42], %90 {strides = array<i32>} : memref<1x8x32xf32, #tpu.memory_space<vmem>>, vector<1x8x32xf32>,
    return
  }
  func.func @transform_0(%arg0: i32) -> (i32, i32, i32) {
    %c0_i32 = arith.constant 0 : i32
    %c0_i32_0 = arith.constant 0 : i32
    %c0_i32_1 = arith.constant 0 : i32
    return %arg0, %c0_i32, %c0_i32_0 : i32, i32, i32
  }
  func.func @transform_1(%arg0: i32) -> (i32, i32, i32) {
    %c0_i32 = arith.constant 0 : i32
    %c0_i32_0 = arith.constant 0 : i32
    %c0_i32_1 = arith.constant 0 : i32
    return %arg0, %c0_i32, %c0_i32_0 : i32, i32, i32
  }
  func.func @transform_2(%arg0: i32) -> (i32, i32, i32) {
    %c0_i32 = arith.constant 0 : i32
    %c0_i32_0 = arith.constant 0 : i32
    %c0_i32_1 = arith.constant 0 : i32
    return %arg0, %c0_i32, %c0_i32_0 : i32, i32, i32
  }
  func.func @transform_3(%arg0: i32) -> (i32, i32) {
    %c0_i32 = arith.constant 0 : i32
    %c0_i32_0 = arith.constant 0 : i32
    %c0_i32_1 = arith.constant 0 : i32
    return %c0_i32, %c0_i32_0 : i32, i32
  }
  func.func @transform_4(%arg0: i32) -> (i32, i32) {
    %c0_i32 = arith.constant 0 : i32
    %c0_i32_0 = arith.constant 0 : i32
    %c0_i32_1 = arith.constant 0 : i32
    return %c0_i32, %c0_i32_0 : i32, i32
  }
  func.func @transform_5(%arg0: i32) -> (i32, i32, i32) {
    %c0_i32 = arith.constant 0 : i32
    %c0_i32_0 = arith.constant 0 : i32
    %c0_i32_1 = arith.constant 0 : i32
    return %arg0, %c0_i32, %c0_i32_0 : i32, i32, i32
  }
}

</mosaic_0001>

<llo_original>
// kernel: attention_layer.1
$region0: #{attention_layer.1}
  #allocation0 [shape = 'u32[]', space=smem, size = 0x4, offset = 0x4, fixed_abs, tag = 'smem constant byte address 0x4 - core index']
  #allocation1 [shape = 'u32[144,128]{1,0:T(1,128)}', space=vmem, size = 0x12000, scoped, tag = 'internal scratch']
  %s0 = inlined_call_operand.hbm [shape: f32[2,8,32], index: 0, kind: input, shape index: {}]
  %s1 = inlined_call_operand.hbm [shape: f32[2,8,32], index: 1, kind: input, shape index: {}]
  %s2 = inlined_call_operand.hbm [shape: f32[2,8,32], index: 2, kind: input, shape index: {}]
  %s3 = inlined_call_operand.hbm [shape: f32[32,128], index: 3, kind: input, shape index: {}]
  %s4 = inlined_call_operand.vmem [shape: f32[1,128], index: 4, kind: input, shape index: {}]
  %s5 = inlined_call_operand.hbm [shape: f32[2,8,32], index: 5, kind: output, shape index: {}]
  %s6 = sld [smem:[#allocation0]]
  $region69: #{attention_layer.1} parent=0
    _
  %s8 = ssub.s32 1, %s6
  %s9 = scalar_select 0, %s8, %s6
  $region1: #{attention_layer.1} parent=0
    #allocation2 [shape = 'u8[8192]{0}', space=vmem, size = 0x2000, scoped, tag = 'input window, operand 0']
    #allocation3 [shape = 's32[2]{0}', space=sflag, size = 0x8, scoped, tag = 'scoped memory for attention_layer.1']
    #allocation4 [shape = 's32[2]{0}', space=sflag, size = 0x8, scoped, tag = 'scoped memory for attention_layer.1']
    #allocation5 [shape = 'u8[8192]{0}', space=vmem, size = 0x2000, scoped, tag = 'input window, operand 1']
    #allocation6 [shape = 's32[2]{0}', space=sflag, size = 0x8, scoped, tag = 'scoped memory for attention_layer.1']
    #allocation7 [shape = 'u8[8192]{0}', space=vmem, size = 0x2000, scoped, tag = 'input window, operand 2']
    #allocation8 [shape = 'u8[16384]{0}', space=vmem, size = 0x4000, scoped, tag = 'input window, operand 3, single buffered']
    #allocation9 [shape = 's32[1]{0}', space=sflag, size = 0x4, scoped, tag = 'scoped memory for attention_layer.1']
    #allocation10 [shape = 'u8[8192]{0}', space=vmem, size = 0x2000, scoped, tag = 'output window, operand 0']
    %10 = vsyncpa [#allocation3], 0
    %s11 = scalar_lea.sflag [#allocation3], 1
    %12 = vsyncpa %s11, 0
    %13 = vsyncpa [#allocation6], 0
    %s14 = scalar_lea.sflag [#allocation6], 1
    %15 = vsyncpa %s14, 0
    %16 = vsyncpa [#allocation9], 0
    %17 = vsyncpa [#allocation4], 0
    %s18 = scalar_lea.sflag [#allocation4], 1
    %19 = vsyncpa %s18, 0
    loop: start=0, step=1, limit=4
    $region2: #{attention_layer.1} parent=1 // loop_pre_header
      _
    $region3: #{attention_layer.1} parent=1 // loop_header
      %s21 = sphi 0, %s25
      %p22 = scmp.ge.s32.totalorder %s21, 4
      %s31 = sphi 0, %s33
      %s34 = sphi 0, %s31
      %s35 = sphi 0, %s34
      %s51 = sphi 0, %s35
      %s57 = sphi 0, %s59
      %s60 = sphi 0, %s57
      %s61 = sphi 0, %s60
      %s77 = sphi 0, %s61
      %s83 = sphi 0, %s85
      %s86 = sphi 0, %s83
      %s87 = sphi 0, %s86
      %s103 = sphi 0, %s87
      %s107 = sphi 0, %s107
      %s109 = sphi 0, %s107
      %s110 = sphi 0, %s109
      %s124 = sphi 0, %s110
      %s128 = sphi 0, %s128
      %s130 = sphi 0, %s128
      %s131 = sphi 0, %s130
      %s145 = sphi 0, %s131
      %s151 = sphi 0, %s153
      %s154 = sphi 0, %s151
      %s155 = sphi 0, %s154
      %s171 = sphi 0, %s155
    $region4: #{attention_layer.1} parent=1 // loop_header_branch
      %24 = sbr.rel (%p22) target = $region8
    $region5: #{attention_layer.1} parent=1 // loop_body
      %s26 = ssub.s32 %s21, 1
      %s27 = ssub.s32 %s21, 2
      %s28 = sadd.s32 %s21, 1
      %s29 = ssub.s32 %s21, %s28
      %p30 = scmp.eq.s32.totalorder %s29, 0
      %s32 = sadd.s32 %s31, 1
      %s33 = scalar_select %p30, %s31, %s32
      %p36 = pneg %p30
      %p37 = scmp.eq.s32.totalorder %s21, 1
      %p38 = por %p36, %p37
      %p39 = scmp.ne.s32.totalorder %s31, %s34
      %p40 = scmp.eq.s32.totalorder %s21, 0
      %p41 = por %p39, %p40
      %p42 = scmp.ne.s32.totalorder %s31, %s34
      %p43 = scmp.eq.s32.totalorder %s26, 1
      %p44 = por %p42, %p43
      %p45 = scmp.ne.s32.totalorder %s34, %s35
      %p46 = scmp.eq.s32.totalorder %s26, 0
      %p47 = por %p45, %p46
      %p48 = scmp.ne.s32.totalorder %s34, %s35
      %p49 = scmp.eq.s32.totalorder %s27, 1
      %p50 = por %p48, %p49
      %p52 = scmp.ne.s32.totalorder %s35, %s51
      %p53 = scmp.eq.s32.totalorder %s27, 0
      %p54 = por %p52, %p53
      %s55 = ssub.s32 %s21, %s28
      %p56 = scmp.eq.s32.totalorder %s55, 0
      %s58 = sadd.s32 %s57, 1
      %s59 = scalar_select %p56, %s57, %s58
      %p62 = pneg %p56
      %p63 = scmp.eq.s32.totalorder %s21, 1
      %p64 = por %p62, %p63
      %p65 = scmp.ne.s32.totalorder %s57, %s60
      %p66 = scmp.eq.s32.totalorder %s21, 0
      %p67 = por %p65, %p66
      %p68 = scmp.ne.s32.totalorder %s57, %s60
      %p69 = scmp.eq.s32.totalorder %s26, 1
      %p70 = por %p68, %p69
      %p71 = scmp.ne.s32.totalorder %s60, %s61
      %p72 = scmp.eq.s32.totalorder %s26, 0
      %p73 = por %p71, %p72
      %p74 = scmp.ne.s32.totalorder %s60, %s61
      %p75 = scmp.eq.s32.totalorder %s27, 1
      %p76 = por %p74, %p75
      %p78 = scmp.ne.s32.totalorder %s61, %s77
      %p79 = scmp.eq.s32.totalorder %s27, 0
      %p80 = por %p78, %p79
      %s81 = ssub.s32 %s21, %s28
      %p82 = scmp.eq.s32.totalorder %s81, 0
      %s84 = sadd.s32 %s83, 1
      %s85 = scalar_select %p82, %s83, %s84
      %p88 = pneg %p82
      %p89 = scmp.eq.s32.totalorder %s21, 1
      %p90 = por %p88, %p89
      %p91 = scmp.ne.s32.totalorder %s83, %s86
      %p92 = scmp.eq.s32.totalorder %s21, 0
      %p93 = por %p91, %p92
      %p94 = scmp.ne.s32.totalorder %s83, %s86
      %p95 = scmp.eq.s32.totalorder %s26, 1
      %p96 = por %p94, %p95
      %p97 = scmp.ne.s32.totalorder %s86, %s87
      %p98 = scmp.eq.s32.totalorder %s26, 0
      %p99 = por %p97, %p98
      %p100 = scmp.ne.s32.totalorder %s86, %s87
      %p101 = scmp.eq.s32.totalorder %s27, 1
      %p102 = por %p100, %p101
      %p104 = scmp.ne.s32.totalorder %s87, %s103
      %p105 = scmp.eq.s32.totalorder %s27, 0
      %p106 = por %p104, %p105
      %s108 = sadd.s32 %s107, 1
      %p111 = scmp.eq.s32.totalorder %s21, 1
      %p112 = scmp.ne.s32.totalorder %s107, %s109
      %p113 = scmp.eq.s32.totalorder %s21, 0
      %p114 = por %p112, %p113
      %p115 = scmp.ne.s32.totalorder %s107, %s109
      %p116 = scmp.eq.s32.totalorder %s26, 1
      %p117 = por %p115, %p116
      %p118 = scmp.ne.s32.totalorder %s109, %s110
      %p119 = scmp.eq.s32.totalorder %s26, 0
      %p120 = por %p118, %p119
      %p121 = scmp.ne.s32.totalorder %s109, %s110
      %p122 = scmp.eq.s32.totalorder %s27, 1
      %p123 = por %p121, %p122
      %p125 = scmp.ne.s32.totalorder %s110, %s124
      %p126 = scmp.eq.s32.totalorder %s27, 0
      %p127 = por %p125, %p126
      %s129 = sadd.s32 %s128, 1
      %p132 = scmp.eq.s32.totalorder %s21, 1
      %p133 = scmp.ne.s32.totalorder %s128, %s130
      %p134 = scmp.eq.s32.totalorder %s21, 0
      %p135 = por %p133, %p134
      %p136 = scmp.ne.s32.totalorder %s128, %s130
      %p137 = scmp.eq.s32.totalorder %s26, 1
      %p138 = por %p136, %p137
      %p139 = scmp.ne.s32.totalorder %s130, %s131
      %p140 = scmp.eq.s32.totalorder %s26, 0
      %p141 = por %p139, %p140
      %p142 = scmp.ne.s32.totalorder %s130, %s131
      %p143 = scmp.eq.s32.totalorder %s27, 1
      %p144 = por %p142, %p143
      %p146 = scmp.ne.s32.totalorder %s131, %s145
      %p147 = scmp.eq.s32.totalorder %s27, 0
      %p148 = por %p146, %p147
      %s149 = ssub.s32 %s21, %s28
      %p150 = scmp.eq.s32.totalorder %s149, 0
      %s152 = sadd.s32 %s151, 1
      %s153 = scalar_select %p150, %s151, %s152
      %p156 = pneg %p150
      %p157 = scmp.eq.s32.totalorder %s21, 1
      %p158 = por %p156, %p157
      %p159 = scmp.ne.s32.totalorder %s151, %s154
      %p160 = scmp.eq.s32.totalorder %s21, 0
      %p161 = por %p159, %p160
      %p162 = scmp.ne.s32.totalorder %s151, %s154
      %p163 = scmp.eq.s32.totalorder %s26, 1
      %p164 = por %p162, %p163
      %p165 = scmp.ne.s32.totalorder %s154, %s155
      %p166 = scmp.eq.s32.totalorder %s26, 0
      %p167 = por %p165, %p166
      %p168 = scmp.ne.s32.totalorder %s154, %s155
      %p169 = scmp.eq.s32.totalorder %s27, 1
      %p170 = por %p168, %p169
      %p172 = scmp.ne.s32.totalorder %s155, %s171
      %p173 = scmp.eq.s32.totalorder %s27, 0
      %p174 = por %p172, %p173
      %p175 = scmp.le.s32.totalorder 1, %s21
      %p176 = scmp.lt.s32.totalorder %s21, 3
      %p177 = pnand %p175, %p176
      %p178 = pneg %p177
      // Predicated region
      $region9: #{attention_layer.1} parent=5 // pred_check
        _
      $region10: #{attention_layer.1} parent=5 // pred_check_branch
        %180 = sbr.rel (%p177) target = $region12
      $region11: #{attention_layer.1} parent=5 // pred_region
        %s181 = ssub.s32 %s21, 1
        // Predicated region
        $region13: #{attention_layer.1} parent=11 // pred_check
          %p182 = pneg %p120
        $region14: #{attention_layer.1} parent=11 // pred_check_branch
          %184 = sbr.rel (%p182) target = $region16
        $region15: #{attention_layer.1} parent=11 // pred_region
          %s186 = ssub.s32 512, 512
          %187 = vsyncadd [#allocation9], %s186
          %s188 = sshll.u32 [#allocation8], 4
          %s189 = int_to_ptr.vmem [resolvable:$true] %s188
          %194 = dma.hbm_to_vmem [thread:$0]  %s3, 512, %s189, [#allocation9], 128, 128, 8
        $region16: #{attention_layer.1} parent=11 // pred_fallthru
          _
        // Predicated region
        $region17: #{attention_layer.1} parent=11 // pred_check
          %p195 = pneg %p141
        $region18: #{attention_layer.1} parent=11 // pred_check_branch
          %197 = sbr.rel (%p195) target = $region20
        $region19: #{attention_layer.1} parent=11 // pred_region
          _
        $region20: #{attention_layer.1} parent=11 // pred_fallthru
          _
      $region12: #{attention_layer.1} parent=5 // pred_fallthru
        _
      %p198 = scmp.lt.s32.totalorder %s21, 2
      // Predicated region
      $region21: #{attention_layer.1} parent=5 // pred_check
        %p199 = pneg %p198
      $region22: #{attention_layer.1} parent=5 // pred_check_branch
        %201 = sbr.rel (%p199) target = $region24
      $region23: #{attention_layer.1} parent=5 // pred_region
        // Predicated region
        $region25: #{attention_layer.1} parent=23 // pred_check
          %p202 = pneg %p41
        $region26: #{attention_layer.1} parent=23 // pred_check_branch
          %204 = sbr.rel (%p202) target = $region28
        $region27: #{attention_layer.1} parent=23 // pred_region
          %s205 = sand.u32 %s31, 1
          %s206 = scalar_lea.sflag [#allocation3], %s205
          %s207 = sand.u32 %s31, 1
          %s208 = smul.addr %s207, 8
          %s209 = scalar_lea.vmem [#allocation2], %s208
          %s211 = ssub.s32 128, 128
          %212 = vsyncadd %s206, %s211
          %s213 = smul.addr %s21, 128
          %s214 = scalar_lea.hbm %s0, %s213
          %s216 = sshll.u32 %s209, 4
          %s217 = int_to_ptr.vmem [resolvable:$true] %s216
          %219 = dma.hbm_to_vmem [thread:$0]  %s214, 128, %s217, %s206
        $region28: #{attention_layer.1} parent=23 // pred_fallthru
          _
        // Predicated region
        $region29: #{attention_layer.1} parent=23 // pred_check
          %p220 = pneg %p67
        $region30: #{attention_layer.1} parent=23 // pred_check_branch
          %222 = sbr.rel (%p220) target = $region32
        $region31: #{attention_layer.1} parent=23 // pred_region
          %s223 = sand.u32 %s21, 1
          %s224 = scalar_lea.sflag [#allocation6], %s223
          %s225 = sand.u32 %s57, 1
          %s226 = smul.addr %s225, 8
          %s227 = scalar_lea.vmem [#allocation5], %s226
          %s229 = ssub.s32 128, 128
          %230 = vsyncadd %s224, %s229
          %s231 = smul.addr %s21, 128
          %s232 = scalar_lea.hbm %s1, %s231
          %s234 = sshll.u32 %s227, 4
          %s235 = int_to_ptr.vmem [resolvable:$true] %s234
          %237 = dma.hbm_to_vmem [thread:$0]  %s232, 128, %s235, %s224
        $region32: #{attention_layer.1} parent=23 // pred_fallthru
          _
        // Predicated region
        $region33: #{attention_layer.1} parent=23 // pred_check
          %p238 = pneg %p93
        $region34: #{attention_layer.1} parent=23 // pred_check_branch
          %240 = sbr.rel (%p238) target = $region36
        $region35: #{attention_layer.1} parent=23 // pred_region
          %s241 = sand.u32 %s21, 1
          %s242 = scalar_lea.sflag [#allocation6], %s241
          %s243 = sand.u32 %s83, 1
          %s244 = smul.addr %s243, 8
          %s245 = scalar_lea.vmem [#allocation7], %s244
          %s247 = ssub.s32 128, 128
          %248 = vsyncadd %s242, %s247
          %s249 = smul.addr %s21, 128
          %s250 = scalar_lea.hbm %s2, %s249
          %s252 = sshll.u32 %s245, 4
          %s253 = int_to_ptr.vmem [resolvable:$true] %s252
          %255 = dma.hbm_to_vmem [thread:$0]  %s250, 128, %s253, %s242
        $region36: #{attention_layer.1} parent=23 // pred_fallthru
          _
      $region24: #{attention_layer.1} parent=5 // pred_fallthru
        _
      %p256 = scmp.le.s32.totalorder 1, %s21
      %p257 = scmp.lt.s32.totalorder %s21, 3
      %p258 = pnand %p256, %p257
      %p259 = pneg %p258
      // Predicated region
      $region37: #{attention_layer.1} parent=5 // pred_check
        _
      $region38: #{attention_layer.1} parent=5 // pred_check_branch
        %261 = sbr.rel (%p258) target = $region40
      $region39: #{attention_layer.1} parent=5 // pred_region
        %s262 = ssub.s32 %s21, 1
        %s263 = sand.u32 %s34, 1
        %s264 = scalar_lea.sflag [#allocation3], %s263
        %s265 = sand.u32 %s34, 1
        %s266 = smul.addr %s265, 8
        %s267 = scalar_lea.vmem [#allocation2], %s266
        // Predicated region
        $region41: #{attention_layer.1} parent=39 // pred_check
          %p268 = pneg %p47
        $region42: #{attention_layer.1} parent=39 // pred_check_branch
          %270 = sbr.rel (%p268) target = $region44
        $region43: #{attention_layer.1} parent=39 // pred_region
          %271 = dma.done %s264, 128
        $region44: #{attention_layer.1} parent=39 // pred_fallthru
          _
        %s272 = sand.u32 %s26, 1
        %s273 = scalar_lea.sflag [#allocation6], %s272
        %s274 = sand.u32 %s60, 1
        %s275 = smul.addr %s274, 8
        %s276 = scalar_lea.vmem [#allocation5], %s275
        // Predicated region
        $region45: #{attention_layer.1} parent=39 // pred_check
          %p277 = pneg %p73
        $region46: #{attention_layer.1} parent=39 // pred_check_branch
          %279 = sbr.rel (%p277) target = $region48
        $region47: #{attention_layer.1} parent=39 // pred_region
          %280 = dma.done %s273, 128
        $region48: #{attention_layer.1} parent=39 // pred_fallthru
          _
        %s281 = sand.u32 %s26, 1
        %s282 = scalar_lea.sflag [#allocation6], %s281
        %s283 = sand.u32 %s86, 1
        %s284 = smul.addr %s283, 8
        %s285 = scalar_lea.vmem [#allocation7], %s284
        // Predicated region
        $region49: #{attention_layer.1} parent=39 // pred_check
          %p286 = pneg %p99
        $region50: #{attention_layer.1} parent=39 // pred_check_branch
          %288 = sbr.rel (%p286) target = $region52
        $region51: #{attention_layer.1} parent=39 // pred_region
          %289 = dma.done %s282, 128
        $region52: #{attention_layer.1} parent=39 // pred_fallthru
          _
        // Predicated region
        $region53: #{attention_layer.1} parent=39 // pred_check
          %p290 = pneg %p120
        $region54: #{attention_layer.1} parent=39 // pred_check_branch
          %292 = sbr.rel (%p290) target = $region56
        $region55: #{attention_layer.1} parent=39 // pred_region
          %293 = dma.done [#allocation9], 512
        $region56: #{attention_layer.1} parent=39 // pred_fallthru
          _
        %s294 = sand.u32 %s34, 1
        %s295 = scalar_lea.sflag [#allocation3], %s294
        %s296 = sand.u32 %s34, 1
        %s297 = smul.addr %s296, 8
        %s298 = scalar_lea.vmem [#allocation2], %s297
        %p299 = pneg %p47
        %p300 = pneg %p44
        %s301 = sand.u32 %s26, 1
        %s302 = scalar_lea.sflag [#allocation6], %s301
        %s303 = sand.u32 %s60, 1
        %s304 = smul.addr %s303, 8
        %s305 = scalar_lea.vmem [#allocation5], %s304
        %p306 = pneg %p73
        %p307 = pneg %p70
        %s308 = sand.u32 %s26, 1
        %s309 = scalar_lea.sflag [#allocation6], %s308
        %s310 = sand.u32 %s86, 1
        %s311 = smul.addr %s310, 8
        %s312 = scalar_lea.vmem [#allocation7], %s311
        %p313 = pneg %p99
        %p314 = pneg %p96
        %p315 = pneg %p120
        %p316 = pneg %p117
        %p317 = pneg %p141
        %p318 = pneg %p138
        %p319 = pneg %p167
        %p320 = pneg %p164
        %s321 = sand.u32 %s154, 1
        %s322 = scalar_lea.sflag [#allocation4], %s321
        %s323 = sand.u32 %s154, 1
        %s324 = smul.addr %s323, 8
        %s325 = scalar_lea.vmem [#allocation10], %s324
        %v326 = vld [vmem:[%s267] sm:$0xff]
        %v327 = vld [vmem:[#allocation8] sm:$0xff]
        %v328 = vld [vmem:[#allocation8 + $0x8] sm:$0xff]
        %v329 = vld [vmem:[#allocation8 + $0x10] sm:$0xff]
        %v330 = vld [vmem:[#allocation8 + $0x18] sm:$0xff]
        %v331 = vld [vmem:[%s4] sm:$0x1]
        %v333 = vlaneseq
        %v334 = vshrl.u32 %v333, 7
        %v335 = vsub.s32 0, %v334
        %v336 = vrot.slane %v331, %v335
        %vm338 = vcmask 261120
        %v340 = vsel %vm338, %v326, 0
        %342 = vmatprep.subr.mxu0 0.0
        %343 = vmatpush1.msra.mxu0 %v327
        %344 = vmatprep.subr.mxu0 0.0
        %345 = vmatpush1.msra.mxu0 %v328
        %346 = vmatprep.subr.mxu0 0.0
        %347 = vmatpush1.msra.mxu0 %v329
        %348 = vmatprep.subr.mxu0 0.0
        %349 = vmatpush1.msra.mxu0 %v330
        %350 = vmatprep.subr.mxu0 0.0
        %351 = vmatpush1.msra.mxu0 0.0
        %352 = vmatprep.subr.mxu0 0.0
        %353 = vmatpush1.msra.mxu0 0.0
        %354 = vmatprep.subr.mxu0 0.0
        %355 = vmatpush1.msra.mxu0 0.0
        %356 = vmatprep.subr.mxu0 0.0
        %357 = vmatpush1.msra.mxu0 0.0
        %358 = vmatprep.subr.mxu0 0.0
        %359 = vmatpush1.msra.mxu0 0.0
        %360 = vmatprep.subr.mxu0 0.0
        %361 = vmatpush1.msra.mxu0 0.0
        %362 = vmatprep.subr.mxu0 0.0
        %363 = vmatpush1.msra.mxu0 0.0
        %364 = vmatprep.subr.mxu0 0.0
        %365 = vmatpush1.msra.mxu0 0.0
        %366 = vmatprep.subr.mxu0 0.0
        %367 = vmatpush1.msra.mxu0 0.0
        %368 = vmatprep.subr.mxu0 0.0
        %369 = vmatpush1.msra.mxu0 0.0
        %370 = vmatprep.subr.mxu0 0.0
        %371 = vmatpush1.msra.mxu0 0.0
        %372 = vmatprep.subr.mxu0 0.0
        %373 = vmatpush1.msra.mxu0 0.0
        %374 = vmatprep.subr.mxu0 0.0
        %375 = vmatpush1.msra.mxu0 0.0
        %376 = vmatprep.subr.mxu0 0.0
        %377 = vmatpush1.msra.mxu0 0.0
        %378 = vmatprep.subr.mxu0 0.0
        %379 = vmatpush1.msra.mxu0 0.0
        %380 = vmatprep.subr.mxu0 0.0
        %381 = vmatpush1.msra.mxu0 0.0
        %382 = vmatprep.subr.mxu0 0.0
        %383 = vmatpush1.msra.mxu0 0.0
        %384 = vmatprep.subr.mxu0 0.0
        %385 = vmatpush1.msra.mxu0 0.0
        %386 = vmatprep.subr.mxu0 0.0
        %387 = vmatpush1.msra.mxu0 0.0
        %388 = vmatprep.subr.mxu0 0.0
        %389 = vmatpush1.msra.mxu0 0.0
        %390 = vmatprep.subr.mxu0 0.0
        %391 = vmatpush1.msra.mxu0 0.0
        %392 = vmatprep.subr.mxu0 0.0
        %393 = vmatpush1.msra.mxu0 0.0
        %394 = vmatprep.subr.mxu0 0.0
        %395 = vmatpush1.msra.mxu0 0.0
        %396 = vmatprep.subr.mxu0 0.0
        %397 = vmatpush1.msra.mxu0 0.0
        %398 = vmatprep.subr.mxu0 0.0
        %399 = vmatpush1.msra.mxu0 0.0
        %400 = vmatprep.subr.mxu0 0.0
        %401 = vmatpush1.msra.mxu0 0.0
        %402 = vmatprep.subr.mxu0 0.0
        %403 = vmatpush1.msra.mxu0 0.0
        %404 = vmatprep.subr.mxu0 0.0
        %405 = vmatpush1.msra.mxu0 0.0
        %406 = vmatprep.mubr.f32.mxu0 0.0
        %407 = vmatmul.mubr.f32.gmra.mrb[0].mxu0 %v340
        %v408 = vpop.f32.mrb[0].mxu0
        %v409 = vadd.f32 %v336, %v408
        %v410 = vpop.f32.mrb[0].mxu0
        %411 = vdwg.mxu0
        %v412 = vld [vmem:[%s276] sm:$0xff]
        %417 = vrot.lane.b32.xlu0 %v327, 96
        %v418 = vpop.permute.xlu0 %417
        %419 = vrot.lane.b32.xlu0 %v328, 96
        %v420 = vpop.permute.xlu0 %419
        %421 = vrot.lane.b32.xlu0 %v329, 96
        %v422 = vpop.permute.xlu0 %421
        %423 = vrot.lane.b32.xlu0 %v330, 96
        %v424 = vpop.permute.xlu0 %423
        %429 = vrot.lane.b32.xlu0 %v336, 96
        %v430 = vpop.permute.xlu0 %429
        %v433 = vsel %vm338, %v412, 0
        %435 = vmatprep.subr.mxu0 0.0
        %436 = vmatpush1.msra.mxu0 %v418
        %437 = vmatprep.subr.mxu0 0.0
        %438 = vmatpush1.msra.mxu0 %v420
        %439 = vmatprep.subr.mxu0 0.0
        %440 = vmatpush1.msra.mxu0 %v422
        %441 = vmatprep.subr.mxu0 0.0
        %442 = vmatpush1.msra.mxu0 %v424
        %443 = vmatprep.subr.mxu0 0.0
        %444 = vmatpush1.msra.mxu0 0.0
        %445 = vmatprep.subr.mxu0 0.0
        %446 = vmatpush1.msra.mxu0 0.0
        %447 = vmatprep.subr.mxu0 0.0
        %448 = vmatpush1.msra.mxu0 0.0
        %449 = vmatprep.subr.mxu0 0.0
        %450 = vmatpush1.msra.mxu0 0.0
        %451 = vmatprep.subr.mxu0 0.0
        %452 = vmatpush1.msra.mxu0 0.0
        %453 = vmatprep.subr.mxu0 0.0
        %454 = vmatpush1.msra.mxu0 0.0
        %455 = vmatprep.subr.mxu0 0.0
        %456 = vmatpush1.msra.mxu0 0.0
        %457 = vmatprep.subr.mxu0 0.0
        %458 = vmatpush1.msra.mxu0 0.0
        %459 = vmatprep.subr.mxu0 0.0
        %460 = vmatpush1.msra.mxu0 0.0
        %461 = vmatprep.subr.mxu0 0.0
        %462 = vmatpush1.msra.mxu0 0.0
        %463 = vmatprep.subr.mxu0 0.0
        %464 = vmatpush1.msra.mxu0 0.0
        %465 = vmatprep.subr.mxu0 0.0
        %466 = vmatpush1.msra.mxu0 0.0
        %467 = vmatprep.subr.mxu0 0.0
        %468 = vmatpush1.msra.mxu0 0.0
        %469 = vmatprep.subr.mxu0 0.0
        %470 = vmatpush1.msra.mxu0 0.0
        %471 = vmatprep.subr.mxu0 0.0
        %472 = vmatpush1.msra.mxu0 0.0
        %473 = vmatprep.subr.mxu0 0.0
        %474 = vmatpush1.msra.mxu0 0.0
        %475 = vmatprep.subr.mxu0 0.0
        %476 = vmatpush1.msra.mxu0 0.0
        %477 = vmatprep.subr.mxu0 0.0
        %478 = vmatpush1.msra.mxu0 0.0
        %479 = vmatprep.subr.mxu0 0.0
        %480 = vmatpush1.msra.mxu0 0.0
        %481 = vmatprep.subr.mxu0 0.0
        %482 = vmatpush1.msra.mxu0 0.0
        %483 = vmatprep.subr.mxu0 0.0
        %484 = vmatpush1.msra.mxu0 0.0
        %485 = vmatprep.subr.mxu0 0.0
        %486 = vmatpush1.msra.mxu0 0.0
        %487 = vmatprep.subr.mxu0 0.0
        %488 = vmatpush1.msra.mxu0 0.0
        %489 = vmatprep.subr.mxu0 0.0
        %490 = vmatpush1.msra.mxu0 0.0
        %491 = vmatprep.subr.mxu0 0.0
        %492 = vmatpush1.msra.mxu0 0.0
        %493 = vmatprep.subr.mxu0 0.0
        %494 = vmatpush1.msra.mxu0 0.0
        %495 = vmatprep.subr.mxu0 0.0
        %496 = vmatpush1.msra.mxu0 0.0
        %497 = vmatprep.subr.mxu0 0.0
        %498 = vmatpush1.msra.mxu0 0.0
        %499 = vmatprep.mubr.f32.mxu0 0.0
        %500 = vmatmul.mubr.f32.gmra.mrb[0].mxu0 %v433
        %v501 = vpop.f32.mrb[0].mxu0
        %v502 = vadd.f32 %v430, %v501
        %v503 = vpop.f32.mrb[0].mxu0
        %504 = vdwg.mxu0
        %v505 = vld [vmem:[%s285] sm:$0xff]
        %506 = vrot.lane.b32.xlu0 %v327, 64
        %v507 = vpop.permute.xlu0 %506
        %508 = vrot.lane.b32.xlu0 %v328, 64
        %v509 = vpop.permute.xlu0 %508
        %510 = vrot.lane.b32.xlu0 %v329, 64
        %v511 = vpop.permute.xlu0 %510
        %512 = vrot.lane.b32.xlu0 %v330, 64
        %v513 = vpop.permute.xlu0 %512
        %518 = vrot.lane.b32.xlu0 %v336, 64
        %v519 = vpop.permute.xlu0 %518
        %v522 = vsel %vm338, %v505, 0
        %524 = vmatprep.subr.mxu0 0.0
        %525 = vmatpush1.msra.mxu0 %v507
        %526 = vmatprep.subr.mxu0 0.0
        %527 = vmatpush1.msra.mxu0 %v509
        %528 = vmatprep.subr.mxu0 0.0
        %529 = vmatpush1.msra.mxu0 %v511
        %530 = vmatprep.subr.mxu0 0.0
        %531 = vmatpush1.msra.mxu0 %v513
        %532 = vmatprep.subr.mxu0 0.0
        %533 = vmatpush1.msra.mxu0 0.0
        %534 = vmatprep.subr.mxu0 0.0
        %535 = vmatpush1.msra.mxu0 0.0
        %536 = vmatprep.subr.mxu0 0.0
        %537 = vmatpush1.msra.mxu0 0.0
        %538 = vmatprep.subr.mxu0 0.0
        %539 = vmatpush1.msra.mxu0 0.0
        %540 = vmatprep.subr.mxu0 0.0
        %541 = vmatpush1.msra.mxu0 0.0
        %542 = vmatprep.subr.mxu0 0.0
        %543 = vmatpush1.msra.mxu0 0.0
        %544 = vmatprep.subr.mxu0 0.0
        %545 = vmatpush1.msra.mxu0 0.0
        %546 = vmatprep.subr.mxu0 0.0
        %547 = vmatpush1.msra.mxu0 0.0
        %548 = vmatprep.subr.mxu0 0.0
        %549 = vmatpush1.msra.mxu0 0.0
        %550 = vmatprep.subr.mxu0 0.0
        %551 = vmatpush1.msra.mxu0 0.0
        %552 = vmatprep.subr.mxu0 0.0
        %553 = vmatpush1.msra.mxu0 0.0
        %554 = vmatprep.subr.mxu0 0.0
        %555 = vmatpush1.msra.mxu0 0.0
        %556 = vmatprep.subr.mxu0 0.0
        %557 = vmatpush1.msra.mxu0 0.0
        %558 = vmatprep.subr.mxu0 0.0
        %559 = vmatpush1.msra.mxu0 0.0
        %560 = vmatprep.subr.mxu0 0.0
        %561 = vmatpush1.msra.mxu0 0.0
        %562 = vmatprep.subr.mxu0 0.0
        %563 = vmatpush1.msra.mxu0 0.0
        %564 = vmatprep.subr.mxu0 0.0
        %565 = vmatpush1.msra.mxu0 0.0
        %566 = vmatprep.subr.mxu0 0.0
        %567 = vmatpush1.msra.mxu0 0.0
        %568 = vmatprep.subr.mxu0 0.0
        %569 = vmatpush1.msra.mxu0 0.0
        %570 = vmatprep.subr.mxu0 0.0
        %571 = vmatpush1.msra.mxu0 0.0
        %572 = vmatprep.subr.mxu0 0.0
        %573 = vmatpush1.msra.mxu0 0.0
        %574 = vmatprep.subr.mxu0 0.0
        %575 = vmatpush1.msra.mxu0 0.0
        %576 = vmatprep.subr.mxu0 0.0
        %577 = vmatpush1.msra.mxu0 0.0
        %578 = vmatprep.subr.mxu0 0.0
        %579 = vmatpush1.msra.mxu0 0.0
        %580 = vmatprep.subr.mxu0 0.0
        %581 = vmatpush1.msra.mxu0 0.0
        %582 = vmatprep.subr.mxu0 0.0
        %583 = vmatpush1.msra.mxu0 0.0
        %584 = vmatprep.subr.mxu0 0.0
        %585 = vmatpush1.msra.mxu0 0.0
        %586 = vmatprep.subr.mxu0 0.0
        %587 = vmatpush1.msra.mxu0 0.0
        %588 = vmatprep.mubr.f32.mxu0 0.0
        %589 = vmatmul.mubr.f32.gmra.mrb[0].mxu0 %v522
        %v590 = vpop.f32.mrb[0].mxu0
        %v591 = vadd.f32 %v519, %v590
        %v592 = vpop.f32.mrb[0].mxu0
        %593 = vdwg.mxu0
        %vm594 = vcmask 64512
        %v596 = vsel %vm594, %v409, 0
        %v599 = vsel %vm594, %v502, 0
        %601 = vmatprep.subr.mxu0 0.0
        %602 = vmatpush1.xpose.msra.mxu0 %v599
        %603 = vmatprep.subr.mxu0 0.0
        %604 = vmatpush1.xpose.msra.mxu0 0.0
        %605 = vmatprep.subr.mxu0 0.0
        %606 = vmatpush1.xpose.msra.mxu0 0.0
        %607 = vmatprep.subr.mxu0 0.0
        %608 = vmatpush1.xpose.msra.mxu0 0.0
        %609 = vmatprep.subr.mxu0 0.0
        %610 = vmatpush1.xpose.msra.mxu0 0.0
        %611 = vmatprep.subr.mxu0 0.0
        %612 = vmatpush1.xpose.msra.mxu0 0.0
        %613 = vmatprep.subr.mxu0 0.0
        %614 = vmatpush1.xpose.msra.mxu0 0.0
        %615 = vmatprep.subr.mxu0 0.0
        %616 = vmatpush1.xpose.msra.mxu0 0.0
        %617 = vmatprep.subr.mxu0 0.0
        %618 = vmatpush1.xpose.msra.mxu0 0.0
        %619 = vmatprep.subr.mxu0 0.0
        %620 = vmatpush1.xpose.msra.mxu0 0.0
        %621 = vmatprep.subr.mxu0 0.0
        %622 = vmatpush1.xpose.msra.mxu0 0.0
        %623 = vmatprep.subr.mxu0 0.0
        %624 = vmatpush1.xpose.msra.mxu0 0.0
        %625 = vmatprep.subr.mxu0 0.0
        %626 = vmatpush1.xpose.msra.mxu0 0.0
        %627 = vmatprep.subr.mxu0 0.0
        %628 = vmatpush1.xpose.msra.mxu0 0.0
        %629 = vmatprep.subr.mxu0 0.0
        %630 = vmatpush1.xpose.msra.mxu0 0.0
        %631 = vmatprep.subr.mxu0 0.0
        %632 = vmatpush1.xpose.msra.mxu0 0.0
        %633 = vmatprep.subr.mxu0 0.0
        %634 = vmatpush1.xpose.msra.mxu0 0.0
        %635 = vmatprep.subr.mxu0 0.0
        %636 = vmatpush1.xpose.msra.mxu0 0.0
        %637 = vmatprep.subr.mxu0 0.0
        %638 = vmatpush1.xpose.msra.mxu0 0.0
        %639 = vmatprep.subr.mxu0 0.0
        %640 = vmatpush1.xpose.msra.mxu0 0.0
        %641 = vmatprep.subr.mxu0 0.0
        %642 = vmatpush1.xpose.msra.mxu0 0.0
        %643 = vmatprep.subr.mxu0 0.0
        %644 = vmatpush1.xpose.msra.mxu0 0.0
        %645 = vmatprep.subr.mxu0 0.0
        %646 = vmatpush1.xpose.msra.mxu0 0.0
        %647 = vmatprep.subr.mxu0 0.0
        %648 = vmatpush1.xpose.msra.mxu0 0.0
        %649 = vmatprep.subr.mxu0 0.0
        %650 = vmatpush1.xpose.msra.mxu0 0.0
        %651 = vmatprep.subr.mxu0 0.0
        %652 = vmatpush1.xpose.msra.mxu0 0.0
        %653 = vmatprep.subr.mxu0 0.0
        %654 = vmatpush1.xpose.msra.mxu0 0.0
        %655 = vmatprep.subr.mxu0 0.0
        %656 = vmatpush1.xpose.msra.mxu0 0.0
        %657 = vmatprep.subr.mxu0 0.0
        %658 = vmatpush1.xpose.msra.mxu0 0.0
        %659 = vmatprep.subr.mxu0 0.0
        %660 = vmatpush1.xpose.msra.mxu0 0.0
        %661 = vmatprep.subr.mxu0 0.0
        %662 = vmatpush1.xpose.msra.mxu0 0.0
        %663 = vmatprep.subr.mxu0 0.0
        %664 = vmatpush1.xpose.msra.mxu0 0.0
        %665 = vmatprep.mubr.f32.mxu0 0.0
        %666 = vmatmul.mubr.f32.gmra.mrb[0].mxu0 %v596
        %v667 = vpop.f32.mrb[0].mxu0
        %v668 = vadd.f32 0.0, %v667
        %v669 = vpop.f32.mrb[0].mxu0
        %670 = vdwg.mxu0
        %v671 = vsel %vm594, %v668, -inf
        %672 = vmax.xlane.f32.xlu0 %v671
        %v673 = vpop.xlane.xlu0 %672
        %v674 = vsub.f32 %v668, %v673
        %v675 = vmul.f32 %v674, 1.442695
        %v676 = vpow.pop %v675
        %v677 = vsel %vm594, %v676, 0.0
        %678 = vadd.xlane.f32.xlu0 %v677
        %v679 = vpop.xlane.xlu0 %678
        %v680 = vrcp.pop %v679
        %v681 = vmul.f32 %v676, %v680
        %v683 = vsel %vm594, %v681, 0
        %685 = vmatprep.subr.mxu0 0.0
        %686 = vmatpush1.msra.mxu0 %v591
        %687 = vmatprep.subr.mxu0 0.0
        %688 = vmatpush1.msra.mxu0 0.0
        %689 = vmatprep.subr.mxu0 0.0
        %690 = vmatpush1.msra.mxu0 0.0
        %691 = vmatprep.subr.mxu0 0.0
        %692 = vmatpush1.msra.mxu0 0.0
        %693 = vmatprep.subr.mxu0 0.0
        %694 = vmatpush1.msra.mxu0 0.0
        %695 = vmatprep.subr.mxu0 0.0
        %696 = vmatpush1.msra.mxu0 0.0
        %697 = vmatprep.subr.mxu0 0.0
        %698 = vmatpush1.msra.mxu0 0.0
        %699 = vmatprep.subr.mxu0 0.0
        %700 = vmatpush1.msra.mxu0 0.0
        %701 = vmatprep.subr.mxu0 0.0
        %702 = vmatpush1.msra.mxu0 0.0
        %703 = vmatprep.subr.mxu0 0.0
        %704 = vmatpush1.msra.mxu0 0.0
        %705 = vmatprep.subr.mxu0 0.0
        %706 = vmatpush1.msra.mxu0 0.0
        %707 = vmatprep.subr.mxu0 0.0
        %708 = vmatpush1.msra.mxu0 0.0
        %709 = vmatprep.subr.mxu0 0.0
        %710 = vmatpush1.msra.mxu0 0.0
        %711 = vmatprep.subr.mxu0 0.0
        %712 = vmatpush1.msra.mxu0 0.0
        %713 = vmatprep.subr.mxu0 0.0
        %714 = vmatpush1.msra.mxu0 0.0
        %715 = vmatprep.subr.mxu0 0.0
        %716 = vmatpush1.msra.mxu0 0.0
        %717 = vmatprep.subr.mxu0 0.0
        %718 = vmatpush1.msra.mxu0 0.0
        %719 = vmatprep.subr.mxu0 0.0
        %720 = vmatpush1.msra.mxu0 0.0
        %721 = vmatprep.subr.mxu0 0.0
        %722 = vmatpush1.msra.mxu0 0.0
        %723 = vmatprep.subr.mxu0 0.0
        %724 = vmatpush1.msra.mxu0 0.0
        %725 = vmatprep.subr.mxu0 0.0
        %726 = vmatpush1.msra.mxu0 0.0
        %727 = vmatprep.subr.mxu0 0.0
        %728 = vmatpush1.msra.mxu0 0.0
        %729 = vmatprep.subr.mxu0 0.0
        %730 = vmatpush1.msra.mxu0 0.0
        %731 = vmatprep.subr.mxu0 0.0
        %732 = vmatpush1.msra.mxu0 0.0
        %733 = vmatprep.subr.mxu0 0.0
        %734 = vmatpush1.msra.mxu0 0.0
        %735 = vmatprep.subr.mxu0 0.0
        %736 = vmatpush1.msra.mxu0 0.0
        %737 = vmatprep.subr.mxu0 0.0
        %738 = vmatpush1.msra.mxu0 0.0
        %739 = vmatprep.subr.mxu0 0.0
        %740 = vmatpush1.msra.mxu0 0.0
        %741 = vmatprep.subr.mxu0 0.0
        %742 = vmatpush1.msra.mxu0 0.0
        %743 = vmatprep.subr.mxu0 0.0
        %744 = vmatpush1.msra.mxu0 0.0
        %745 = vmatprep.subr.mxu0 0.0
        %746 = vmatpush1.msra.mxu0 0.0
        %747 = vmatprep.subr.mxu0 0.0
        %748 = vmatpush1.msra.mxu0 0.0
        %749 = vmatprep.mubr.f32.mxu0 0.0
        %750 = vmatmul.mubr.f32.gmra.mrb[0].mxu0 %v683
        %v751 = vpop.f32.mrb[0].mxu0
        %v752 = vadd.f32 0.0, %v751
        %v753 = vpop.f32.mrb[0].mxu0
        %754 = vdwg.mxu0
        %755 = vrot.lane.b32.xlu0 %v409, 120
        %v756 = vpop.permute.xlu0 %755
        %757 = vrot.lane.b32.xlu0 %v502, 120
        %v758 = vpop.permute.xlu0 %757
        %v759 = vsel %vm594, %v756, 0
        %v761 = vsel %vm594, %v758, 0
        %763 = vmatprep.subr.mxu0 0.0
        %764 = vmatpush1.xpose.msra.mxu0 %v761
        %765 = vmatprep.subr.mxu0 0.0
        %766 = vmatpush1.xpose.msra.mxu0 0.0
        %767 = vmatprep.subr.mxu0 0.0
        %768 = vmatpush1.xpose.msra.mxu0 0.0
        %769 = vmatprep.subr.mxu0 0.0
        %770 = vmatpush1.xpose.msra.mxu0 0.0
        %771 = vmatprep.subr.mxu0 0.0
        %772 = vmatpush1.xpose.msra.mxu0 0.0
        %773 = vmatprep.subr.mxu0 0.0
        %774 = vmatpush1.xpose.msra.mxu0 0.0
        %775 = vmatprep.subr.mxu0 0.0
        %776 = vmatpush1.xpose.msra.mxu0 0.0
        %777 = vmatprep.subr.mxu0 0.0
        %778 = vmatpush1.xpose.msra.mxu0 0.0
        %779 = vmatprep.subr.mxu0 0.0
        %780 = vmatpush1.xpose.msra.mxu0 0.0
        %781 = vmatprep.subr.mxu0 0.0
        %782 = vmatpush1.xpose.msra.mxu0 0.0
        %783 = vmatprep.subr.mxu0 0.0
        %784 = vmatpush1.xpose.msra.mxu0 0.0
        %785 = vmatprep.subr.mxu0 0.0
        %786 = vmatpush1.xpose.msra.mxu0 0.0
        %787 = vmatprep.subr.mxu0 0.0
        %788 = vmatpush1.xpose.msra.mxu0 0.0
        %789 = vmatprep.subr.mxu0 0.0
        %790 = vmatpush1.xpose.msra.mxu0 0.0
        %791 = vmatprep.subr.mxu0 0.0
        %792 = vmatpush1.xpose.msra.mxu0 0.0
        %793 = vmatprep.subr.mxu0 0.0
        %794 = vmatpush1.xpose.msra.mxu0 0.0
        %795 = vmatprep.subr.mxu0 0.0
        %796 = vmatpush1.xpose.msra.mxu0 0.0
        %797 = vmatprep.subr.mxu0 0.0
        %798 = vmatpush1.xpose.msra.mxu0 0.0
        %799 = vmatprep.subr.mxu0 0.0
        %800 = vmatpush1.xpose.msra.mxu0 0.0
        %801 = vmatprep.subr.mxu0 0.0
        %802 = vmatpush1.xpose.msra.mxu0 0.0
        %803 = vmatprep.subr.mxu0 0.0
        %804 = vmatpush1.xpose.msra.mxu0 0.0
        %805 = vmatprep.subr.mxu0 0.0
        %806 = vmatpush1.xpose.msra.mxu0 0.0
        %807 = vmatprep.subr.mxu0 0.0
        %808 = vmatpush1.xpose.msra.mxu0 0.0
        %809 = vmatprep.subr.mxu0 0.0
        %810 = vmatpush1.xpose.msra.mxu0 0.0
        %811 = vmatprep.subr.mxu0 0.0
        %812 = vmatpush1.xpose.msra.mxu0 0.0
        %813 = vmatprep.subr.mxu0 0.0
        %814 = vmatpush1.xpose.msra.mxu0 0.0
        %815 = vmatprep.subr.mxu0 0.0
        %816 = vmatpush1.xpose.msra.mxu0 0.0
        %817 = vmatprep.subr.mxu0 0.0
        %818 = vmatpush1.xpose.msra.mxu0 0.0
        %819 = vmatprep.subr.mxu0 0.0
        %820 = vmatpush1.xpose.msra.mxu0 0.0
        %821 = vmatprep.subr.mxu0 0.0
        %822 = vmatpush1.xpose.msra.mxu0 0.0
        %823 = vmatprep.subr.mxu0 0.0
        %824 = vmatpush1.xpose.msra.mxu0 0.0
        %825 = vmatprep.subr.mxu0 0.0
        %826 = vmatpush1.xpose.msra.mxu0 0.0
        %827 = vmatprep.mubr.f32.mxu0 0.0
        %828 = vmatmul.mubr.f32.gmra.mrb[0].mxu0 %v759
        %v829 = vpop.f32.mrb[0].mxu0
        %v830 = vadd.f32 0.0, %v829
        %v831 = vpop.f32.mrb[0].mxu0
        %832 = vdwg.mxu0
        %v833 = vsel %vm594, %v830, -inf
        %834 = vmax.xlane.f32.xlu0 %v833
        %v835 = vpop.xlane.xlu0 %834
        %v836 = vsub.f32 %v830, %v835
        %v837 = vmul.f32 %v836, 1.442695
        %v838 = vpow.pop %v837
        %v839 = vsel %vm594, %v838, 0.0
        %840 = vadd.xlane.f32.xlu0 %v839
        %v841 = vpop.xlane.xlu0 %840
        %v842 = vrcp.pop %v841
        %v843 = vmul.f32 %v838, %v842
        %845 = vrot.lane.b32.xlu0 %v591, 120
        %v846 = vpop.permute.xlu0 %845
        %v849 = vsel %vm594, %v843, 0
        %851 = vmatprep.subr.mxu0 0.0
        %852 = vmatpush1.msra.mxu0 %v846
        %853 = vmatprep.subr.mxu0 0.0
        %854 = vmatpush1.msra.mxu0 0.0
        %855 = vmatprep.subr.mxu0 0.0
        %856 = vmatpush1.msra.mxu0 0.0
        %857 = vmatprep.subr.mxu0 0.0
        %858 = vmatpush1.msra.mxu0 0.0
        %859 = vmatprep.subr.mxu0 0.0
        %860 = vmatpush1.msra.mxu0 0.0
        %861 = vmatprep.subr.mxu0 0.0
        %862 = vmatpush1.msra.mxu0 0.0
        %863 = vmatprep.subr.mxu0 0.0
        %864 = vmatpush1.msra.mxu0 0.0
        %865 = vmatprep.subr.mxu0 0.0
        %866 = vmatpush1.msra.mxu0 0.0
        %867 = vmatprep.subr.mxu0 0.0
        %868 = vmatpush1.msra.mxu0 0.0
        %869 = vmatprep.subr.mxu0 0.0
        %870 = vmatpush1.msra.mxu0 0.0
        %871 = vmatprep.subr.mxu0 0.0
        %872 = vmatpush1.msra.mxu0 0.0
        %873 = vmatprep.subr.mxu0 0.0
        %874 = vmatpush1.msra.mxu0 0.0
        %875 = vmatprep.subr.mxu0 0.0
        %876 = vmatpush1.msra.mxu0 0.0
        %877 = vmatprep.subr.mxu0 0.0
        %878 = vmatpush1.msra.mxu0 0.0
        %879 = vmatprep.subr.mxu0 0.0
        %880 = vmatpush1.msra.mxu0 0.0
        %881 = vmatprep.subr.mxu0 0.0
        %882 = vmatpush1.msra.mxu0 0.0
        %883 = vmatprep.subr.mxu0 0.0
        %884 = vmatpush1.msra.mxu0 0.0
        %885 = vmatprep.subr.mxu0 0.0
        %886 = vmatpush1.msra.mxu0 0.0
        %887 = vmatprep.subr.mxu0 0.0
        %888 = vmatpush1.msra.mxu0 0.0
        %889 = vmatprep.subr.mxu0 0.0
        %890 = vmatpush1.msra.mxu0 0.0
        %891 = vmatprep.subr.mxu0 0.0
        %892 = vmatpush1.msra.mxu0 0.0
        %893 = vmatprep.subr.mxu0 0.0
        %894 = vmatpush1.msra.mxu0 0.0
        %895 = vmatprep.subr.mxu0 0.0
        %896 = vmatpush1.msra.mxu0 0.0
        %897 = vmatprep.subr.mxu0 0.0
        %898 = vmatpush1.msra.mxu0 0.0
        %899 = vmatprep.subr.mxu0 0.0
        %900 = vmatpush1.msra.mxu0 0.0
        %901 = vmatprep.subr.mxu0 0.0
        %902 = vmatpush1.msra.mxu0 0.0
        %903 = vmatprep.subr.mxu0 0.0
        %904 = vmatpush1.msra.mxu0 0.0
        %905 = vmatprep.subr.mxu0 0.0
        %906 = vmatpush1.msra.mxu0 0.0
        %907 = vmatprep.subr.mxu0 0.0
        %908 = vmatpush1.msra.mxu0 0.0
        %909 = vmatprep.subr.mxu0 0.0
        %910 = vmatpush1.msra.mxu0 0.0
        %911 = vmatprep.subr.mxu0 0.0
        %912 = vmatpush1.msra.mxu0 0.0
        %913 = vmatprep.subr.mxu0 0.0
        %914 = vmatpush1.msra.mxu0 0.0
        %915 = vmatprep.mubr.f32.mxu0 0.0
        %916 = vmatmul.mubr.f32.gmra.mrb[0].mxu0 %v849
        %v917 = vpop.f32.mrb[0].mxu0
        %v918 = vadd.f32 0.0, %v917
        %v919 = vpop.f32.mrb[0].mxu0
        %920 = vdwg.mxu0
        %921 = vrot.lane.b32.xlu0 %v409, 112
        %v922 = vpop.permute.xlu0 %921
        %923 = vrot.lane.b32.xlu0 %v502, 112
        %v924 = vpop.permute.xlu0 %923
        %v925 = vsel %vm594, %v922, 0
        %v927 = vsel %vm594, %v924, 0
        %929 = vmatprep.subr.mxu0 0.0
        %930 = vmatpush1.xpose.msra.mxu0 %v927
        %931 = vmatprep.subr.mxu0 0.0
        %932 = vmatpush1.xpose.msra.mxu0 0.0
        %933 = vmatprep.subr.mxu0 0.0
        %934 = vmatpush1.xpose.msra.mxu0 0.0
        %935 = vmatprep.subr.mxu0 0.0
        %936 = vmatpush1.xpose.msra.mxu0 0.0
        %937 = vmatprep.subr.mxu0 0.0
        %938 = vmatpush1.xpose.msra.mxu0 0.0
        %939 = vmatprep.subr.mxu0 0.0
        %940 = vmatpush1.xpose.msra.mxu0 0.0
        %941 = vmatprep.subr.mxu0 0.0
        %942 = vmatpush1.xpose.msra.mxu0 0.0
        %943 = vmatprep.subr.mxu0 0.0
        %944 = vmatpush1.xpose.msra.mxu0 0.0
        %945 = vmatprep.subr.mxu0 0.0
        %946 = vmatpush1.xpose.msra.mxu0 0.0
        %947 = vmatprep.subr.mxu0 0.0
        %948 = vmatpush1.xpose.msra.mxu0 0.0
        %949 = vmatprep.subr.mxu0 0.0
        %950 = vmatpush1.xpose.msra.mxu0 0.0
        %951 = vmatprep.subr.mxu0 0.0
        %952 = vmatpush1.xpose.msra.mxu0 0.0
        %953 = vmatprep.subr.mxu0 0.0
        %954 = vmatpush1.xpose.msra.mxu0 0.0
        %955 = vmatprep.subr.mxu0 0.0
        %956 = vmatpush1.xpose.msra.mxu0 0.0
        %957 = vmatprep.subr.mxu0 0.0
        %958 = vmatpush1.xpose.msra.mxu0 0.0
        %959 = vmatprep.subr.mxu0 0.0
        %960 = vmatpush1.xpose.msra.mxu0 0.0
        %961 = vmatprep.subr.mxu0 0.0
        %962 = vmatpush1.xpose.msra.mxu0 0.0
        %963 = vmatprep.subr.mxu0 0.0
        %964 = vmatpush1.xpose.msra.mxu0 0.0
        %965 = vmatprep.subr.mxu0 0.0
        %966 = vmatpush1.xpose.msra.mxu0 0.0
        %967 = vmatprep.subr.mxu0 0.0
        %968 = vmatpush1.xpose.msra.mxu0 0.0
        %969 = vmatprep.subr.mxu0 0.0
        %970 = vmatpush1.xpose.msra.mxu0 0.0
        %971 = vmatprep.subr.mxu0 0.0
        %972 = vmatpush1.xpose.msra.mxu0 0.0
        %973 = vmatprep.subr.mxu0 0.0
        %974 = vmatpush1.xpose.msra.mxu0 0.0
        %975 = vmatprep.subr.mxu0 0.0
        %976 = vmatpush1.xpose.msra.mxu0 0.0
        %977 = vmatprep.subr.mxu0 0.0
        %978 = vmatpush1.xpose.msra.mxu0 0.0
        %979 = vmatprep.subr.mxu0 0.0
        %980 = vmatpush1.xpose.msra.mxu0 0.0
        %981 = vmatprep.subr.mxu0 0.0
        %982 = vmatpush1.xpose.msra.mxu0 0.0
        %983 = vmatprep.subr.mxu0 0.0
        %984 = vmatpush1.xpose.msra.mxu0 0.0
        %985 = vmatprep.subr.mxu0 0.0
        %986 = vmatpush1.xpose.msra.mxu0 0.0
        %987 = vmatprep.subr.mxu0 0.0
        %988 = vmatpush1.xpose.msra.mxu0 0.0
        %989 = vmatprep.subr.mxu0 0.0
        %990 = vmatpush1.xpose.msra.mxu0 0.0
        %991 = vmatprep.subr.mxu0 0.0
        %992 = vmatpush1.xpose.msra.mxu0 0.0
        %993 = vmatprep.mubr.f32.mxu0 0.0
        %994 = vmatmul.mubr.f32.gmra.mrb[0].mxu0 %v925
        %v995 = vpop.f32.mrb[0].mxu0
        %v996 = vadd.f32 0.0, %v995
        %v997 = vpop.f32.mrb[0].mxu0
        %998 = vdwg.mxu0
        %v999 = vsel %vm594, %v996, -inf
        %1000 = vmax.xlane.f32.xlu0 %v999
        %v1001 = vpop.xlane.xlu0 %1000
        %v1002 = vsub.f32 %v996, %v1001
        %v1003 = vmul.f32 %v1002, 1.442695
        %v1004 = vpow.pop %v1003
        %v1005 = vsel %vm594, %v1004, 0.0
        %1006 = vadd.xlane.f32.xlu0 %v1005
        %v1007 = vpop.xlane.xlu0 %1006
        %v1008 = vrcp.pop %v1007
        %v1009 = vmul.f32 %v1004, %v1008
        %1010 = vrot.lane.b32.xlu0 %v591, 112
        %v1011 = vpop.permute.xlu0 %1010
        %v1014 = vsel %vm594, %v1009, 0
        %1016 = vmatprep.subr.mxu0 0.0
        %1017 = vmatpush1.msra.mxu0 %v1011
        %1018 = vmatprep.subr.mxu0 0.0
        %1019 = vmatpush1.msra.mxu0 0.0
        %1020 = vmatprep.subr.mxu0 0.0
        %1021 = vmatpush1.msra.mxu0 0.0
        %1022 = vmatprep.subr.mxu0 0.0
        %1023 = vmatpush1.msra.mxu0 0.0
        %1024 = vmatprep.subr.mxu0 0.0
        %1025 = vmatpush1.msra.mxu0 0.0
        %1026 = vmatprep.subr.mxu0 0.0
        %1027 = vmatpush1.msra.mxu0 0.0
        %1028 = vmatprep.subr.mxu0 0.0
        %1029 = vmatpush1.msra.mxu0 0.0
        %1030 = vmatprep.subr.mxu0 0.0
        %1031 = vmatpush1.msra.mxu0 0.0
        %1032 = vmatprep.subr.mxu0 0.0
        %1033 = vmatpush1.msra.mxu0 0.0
        %1034 = vmatprep.subr.mxu0 0.0
        %1035 = vmatpush1.msra.mxu0 0.0
        %1036 = vmatprep.subr.mxu0 0.0
        %1037 = vmatpush1.msra.mxu0 0.0
        %1038 = vmatprep.subr.mxu0 0.0
        %1039 = vmatpush1.msra.mxu0 0.0
        %1040 = vmatprep.subr.mxu0 0.0
        %1041 = vmatpush1.msra.mxu0 0.0
        %1042 = vmatprep.subr.mxu0 0.0
        %1043 = vmatpush1.msra.mxu0 0.0
        %1044 = vmatprep.subr.mxu0 0.0
        %1045 = vmatpush1.msra.mxu0 0.0
        %1046 = vmatprep.subr.mxu0 0.0
        %1047 = vmatpush1.msra.mxu0 0.0
        %1048 = vmatprep.subr.mxu0 0.0
        %1049 = vmatpush1.msra.mxu0 0.0
        %1050 = vmatprep.subr.mxu0 0.0
        %1051 = vmatpush1.msra.mxu0 0.0
        %1052 = vmatprep.subr.mxu0 0.0
        %1053 = vmatpush1.msra.mxu0 0.0
        %1054 = vmatprep.subr.mxu0 0.0
        %1055 = vmatpush1.msra.mxu0 0.0
        %1056 = vmatprep.subr.mxu0 0.0
        %1057 = vmatpush1.msra.mxu0 0.0
        %1058 = vmatprep.subr.mxu0 0.0
        %1059 = vmatpush1.msra.mxu0 0.0
        %1060 = vmatprep.subr.mxu0 0.0
        %1061 = vmatpush1.msra.mxu0 0.0
        %1062 = vmatprep.subr.mxu0 0.0
        %1063 = vmatpush1.msra.mxu0 0.0
        %1064 = vmatprep.subr.mxu0 0.0
        %1065 = vmatpush1.msra.mxu0 0.0
        %1066 = vmatprep.subr.mxu0 0.0
        %1067 = vmatpush1.msra.mxu0 0.0
        %1068 = vmatprep.subr.mxu0 0.0
        %1069 = vmatpush1.msra.mxu0 0.0
        %1070 = vmatprep.subr.mxu0 0.0
        %1071 = vmatpush1.msra.mxu0 0.0
        %1072 = vmatprep.subr.mxu0 0.0
        %1073 = vmatpush1.msra.mxu0 0.0
        %1074 = vmatprep.subr.mxu0 0.0
        %1075 = vmatpush1.msra.mxu0 0.0
        %1076 = vmatprep.subr.mxu0 0.0
        %1077 = vmatpush1.msra.mxu0 0.0
        %1078 = vmatprep.subr.mxu0 0.0
        %1079 = vmatpush1.msra.mxu0 0.0
        %1080 = vmatprep.mubr.f32.mxu0 0.0
        %1081 = vmatmul.mubr.f32.gmra.mrb[0].mxu0 %v1014
        %v1082 = vpop.f32.mrb[0].mxu0
        %v1083 = vadd.f32 0.0, %v1082
        %v1084 = vpop.f32.mrb[0].mxu0
        %1085 = vdwg.mxu0
        %1086 = vrot.lane.b32.xlu0 %v409, 104
        %v1087 = vpop.permute.xlu0 %1086
        %1088 = vrot.lane.b32.xlu0 %v502, 104
        %v1089 = vpop.permute.xlu0 %1088
        %v1090 = vsel %vm594, %v1087, 0
        %v1092 = vsel %vm594, %v1089, 0
        %1094 = vmatprep.subr.mxu0 0.0
        %1095 = vmatpush1.xpose.msra.mxu0 %v1092
        %1096 = vmatprep.subr.mxu0 0.0
        %1097 = vmatpush1.xpose.msra.mxu0 0.0
        %1098 = vmatprep.subr.mxu0 0.0
        %1099 = vmatpush1.xpose.msra.mxu0 0.0
        %1100 = vmatprep.subr.mxu0 0.0
        %1101 = vmatpush1.xpose.msra.mxu0 0.0
        %1102 = vmatprep.subr.mxu0 0.0
        %1103 = vmatpush1.xpose.msra.mxu0 0.0
        %1104 = vmatprep.subr.mxu0 0.0
        %1105 = vmatpush1.xpose.msra.mxu0 0.0
        %1106 = vmatprep.subr.mxu0 0.0
        %1107 = vmatpush1.xpose.msra.mxu0 0.0
        %1108 = vmatprep.subr.mxu0 0.0
        %1109 = vmatpush1.xpose.msra.mxu0 0.0
        %1110 = vmatprep.subr.mxu0 0.0
        %1111 = vmatpush1.xpose.msra.mxu0 0.0
        %1112 = vmatprep.subr.mxu0 0.0
        %1113 = vmatpush1.xpose.msra.mxu0 0.0
        %1114 = vmatprep.subr.mxu0 0.0
        %1115 = vmatpush1.xpose.msra.mxu0 0.0
        %1116 = vmatprep.subr.mxu0 0.0
        %1117 = vmatpush1.xpose.msra.mxu0 0.0
        %1118 = vmatprep.subr.mxu0 0.0
        %1119 = vmatpush1.xpose.msra.mxu0 0.0
        %1120 = vmatprep.subr.mxu0 0.0
        %1121 = vmatpush1.xpose.msra.mxu0 0.0
        %1122 = vmatprep.subr.mxu0 0.0
        %1123 = vmatpush1.xpose.msra.mxu0 0.0
        %1124 = vmatprep.subr.mxu0 0.0
        %1125 = vmatpush1.xpose.msra.mxu0 0.0
        %1126 = vmatprep.subr.mxu0 0.0
        %1127 = vmatpush1.xpose.msra.mxu0 0.0
        %1128 = vmatprep.subr.mxu0 0.0
        %1129 = vmatpush1.xpose.msra.mxu0 0.0
        %1130 = vmatprep.subr.mxu0 0.0
        %1131 = vmatpush1.xpose.msra.mxu0 0.0
        %1132 = vmatprep.subr.mxu0 0.0
        %1133 = vmatpush1.xpose.msra.mxu0 0.0
        %1134 = vmatprep.subr.mxu0 0.0
        %1135 = vmatpush1.xpose.msra.mxu0 0.0
        %1136 = vmatprep.subr.mxu0 0.0
        %1137 = vmatpush1.xpose.msra.mxu0 0.0
        %1138 = vmatprep.subr.mxu0 0.0
        %1139 = vmatpush1.xpose.msra.mxu0 0.0
        %1140 = vmatprep.subr.mxu0 0.0
        %1141 = vmatpush1.xpose.msra.mxu0 0.0
        %1142 = vmatprep.subr.mxu0 0.0
        %1143 = vmatpush1.xpose.msra.mxu0 0.0
        %1144 = vmatprep.subr.mxu0 0.0
        %1145 = vmatpush1.xpose.msra.mxu0 0.0
        %1146 = vmatprep.subr.mxu0 0.0
        %1147 = vmatpush1.xpose.msra.mxu0 0.0
        %1148 = vmatprep.subr.mxu0 0.0
        %1149 = vmatpush1.xpose.msra.mxu0 0.0
        %1150 = vmatprep.subr.mxu0 0.0
        %1151 = vmatpush1.xpose.msra.mxu0 0.0
        %1152 = vmatprep.subr.mxu0 0.0
        %1153 = vmatpush1.xpose.msra.mxu0 0.0
        %1154 = vmatprep.subr.mxu0 0.0
        %1155 = vmatpush1.xpose.msra.mxu0 0.0
        %1156 = vmatprep.subr.mxu0 0.0
        %1157 = vmatpush1.xpose.msra.mxu0 0.0
        %1158 = vmatprep.mubr.f32.mxu0 0.0
        %1159 = vmatmul.mubr.f32.gmra.mrb[0].mxu0 %v1090
        %v1160 = vpop.f32.mrb[0].mxu0
        %v1161 = vadd.f32 0.0, %v1160
        %v1162 = vpop.f32.mrb[0].mxu0
        %1163 = vdwg.mxu0
        %v1164 = vsel %vm594, %v1161, -inf
        %1165 = vmax.xlane.f32.xlu0 %v1164
        %v1166 = vpop.xlane.xlu0 %1165
        %v1167 = vsub.f32 %v1161, %v1166
        %v1168 = vmul.f32 %v1167, 1.442695
        %v1169 = vpow.pop %v1168
        %v1170 = vsel %vm594, %v1169, 0.0
        %1171 = vadd.xlane.f32.xlu0 %v1170
        %v1172 = vpop.xlane.xlu0 %1171
        %v1173 = vrcp.pop %v1172
        %v1174 = vmul.f32 %v1169, %v1173
        %1175 = vrot.lane.b32.xlu0 %v591, 104
        %v1176 = vpop.permute.xlu0 %1175
        %v1179 = vsel %vm594, %v1174, 0
        %1181 = vmatprep.subr.mxu0 0.0
        %1182 = vmatpush1.msra.mxu0 %v1176
        %1183 = vmatprep.subr.mxu0 0.0
        %1184 = vmatpush1.msra.mxu0 0.0
        %1185 = vmatprep.subr.mxu0 0.0
        %1186 = vmatpush1.msra.mxu0 0.0
        %1187 = vmatprep.subr.mxu0 0.0
        %1188 = vmatpush1.msra.mxu0 0.0
        %1189 = vmatprep.subr.mxu0 0.0
        %1190 = vmatpush1.msra.mxu0 0.0
        %1191 = vmatprep.subr.mxu0 0.0
        %1192 = vmatpush1.msra.mxu0 0.0
        %1193 = vmatprep.subr.mxu0 0.0
        %1194 = vmatpush1.msra.mxu0 0.0
        %1195 = vmatprep.subr.mxu0 0.0
        %1196 = vmatpush1.msra.mxu0 0.0
        %1197 = vmatprep.subr.mxu0 0.0
        %1198 = vmatpush1.msra.mxu0 0.0
        %1199 = vmatprep.subr.mxu0 0.0
        %1200 = vmatpush1.msra.mxu0 0.0
        %1201 = vmatprep.subr.mxu0 0.0
        %1202 = vmatpush1.msra.mxu0 0.0
        %1203 = vmatprep.subr.mxu0 0.0
        %1204 = vmatpush1.msra.mxu0 0.0
        %1205 = vmatprep.subr.mxu0 0.0
        %1206 = vmatpush1.msra.mxu0 0.0
        %1207 = vmatprep.subr.mxu0 0.0
        %1208 = vmatpush1.msra.mxu0 0.0
        %1209 = vmatprep.subr.mxu0 0.0
        %1210 = vmatpush1.msra.mxu0 0.0
        %1211 = vmatprep.subr.mxu0 0.0
        %1212 = vmatpush1.msra.mxu0 0.0
        %1213 = vmatprep.subr.mxu0 0.0
        %1214 = vmatpush1.msra.mxu0 0.0
        %1215 = vmatprep.subr.mxu0 0.0
        %1216 = vmatpush1.msra.mxu0 0.0
        %1217 = vmatprep.subr.mxu0 0.0
        %1218 = vmatpush1.msra.mxu0 0.0
        %1219 = vmatprep.subr.mxu0 0.0
        %1220 = vmatpush1.msra.mxu0 0.0
        %1221 = vmatprep.subr.mxu0 0.0
        %1222 = vmatpush1.msra.mxu0 0.0
        %1223 = vmatprep.subr.mxu0 0.0
        %1224 = vmatpush1.msra.mxu0 0.0
        %1225 = vmatprep.subr.mxu0 0.0
        %1226 = vmatpush1.msra.mxu0 0.0
        %1227 = vmatprep.subr.mxu0 0.0
        %1228 = vmatpush1.msra.mxu0 0.0
        %1229 = vmatprep.subr.mxu0 0.0
        %1230 = vmatpush1.msra.mxu0 0.0
        %1231 = vmatprep.subr.mxu0 0.0
        %1232 = vmatpush1.msra.mxu0 0.0
        %1233 = vmatprep.subr.mxu0 0.0
        %1234 = vmatpush1.msra.mxu0 0.0
        %1235 = vmatprep.subr.mxu0 0.0
        %1236 = vmatpush1.msra.mxu0 0.0
        %1237 = vmatprep.subr.mxu0 0.0
        %1238 = vmatpush1.msra.mxu0 0.0
        %1239 = vmatprep.subr.mxu0 0.0
        %1240 = vmatpush1.msra.mxu0 0.0
        %1241 = vmatprep.subr.mxu0 0.0
        %1242 = vmatpush1.msra.mxu0 0.0
        %1243 = vmatprep.subr.mxu0 0.0
        %1244 = vmatpush1.msra.mxu0 0.0
        %1245 = vmatprep.mubr.f32.mxu0 0.0
        %1246 = vmatmul.mubr.f32.gmra.mrb[0].mxu0 %v1179
        %v1247 = vpop.f32.mrb[0].mxu0
        %v1248 = vadd.f32 0.0, %v1247
        %v1249 = vpop.f32.mrb[0].mxu0
        %1250 = vdwg.mxu0
        %1252 = vrot.lane.b32.xlu0 %v918, 8
        %v1253 = vpop.permute.xlu0 %1252
        %1256 = vrot.lane.b32.xlu0 %v1083, 16
        %v1257 = vpop.permute.xlu0 %1256
        %1260 = vrot.lane.b32.xlu0 %v1248, 24
        %v1261 = vpop.permute.xlu0 %1260
        %v1263 = vsel %vm594, %v752, %v1253
        %vm1264 = vcmask 130048
        %v1265 = vsel %vm1264, %v1263, %v1257
        %vm1266 = vcmask 195584
        %v1267 = vsel %vm1266, %v1265, %v1261
        %1268 = vrot.lane.b32.xlu0 %v327, 32
        %v1269 = vpop.permute.xlu0 %1268
        %1270 = vrot.lane.b32.xlu0 %v328, 32
        %v1271 = vpop.permute.xlu0 %1270
        %1272 = vrot.lane.b32.xlu0 %v329, 32
        %v1273 = vpop.permute.xlu0 %1272
        %1274 = vrot.lane.b32.xlu0 %v330, 32
        %v1275 = vpop.permute.xlu0 %1274
        %1280 = vrot.lane.b32.xlu0 %v336, 32
        %v1281 = vpop.permute.xlu0 %1280
        %v1284 = vsel %vm338, %v1267, 0
        %1286 = vmatprep.subr.mxu0 0.0
        %1287 = vmatpush1.msra.mxu0 %v1269
        %1288 = vmatprep.subr.mxu0 0.0
        %1289 = vmatpush1.msra.mxu0 %v1271
        %1290 = vmatprep.subr.mxu0 0.0
        %1291 = vmatpush1.msra.mxu0 %v1273
        %1292 = vmatprep.subr.mxu0 0.0
        %1293 = vmatpush1.msra.mxu0 %v1275
        %1294 = vmatprep.subr.mxu0 0.0
        %1295 = vmatpush1.msra.mxu0 0.0
        %1296 = vmatprep.subr.mxu0 0.0
        %1297 = vmatpush1.msra.mxu0 0.0
        %1298 = vmatprep.subr.mxu0 0.0
        %1299 = vmatpush1.msra.mxu0 0.0
        %1300 = vmatprep.subr.mxu0 0.0
        %1301 = vmatpush1.msra.mxu0 0.0
        %1302 = vmatprep.subr.mxu0 0.0
        %1303 = vmatpush1.msra.mxu0 0.0
        %1304 = vmatprep.subr.mxu0 0.0
        %1305 = vmatpush1.msra.mxu0 0.0
        %1306 = vmatprep.subr.mxu0 0.0
        %1307 = vmatpush1.msra.mxu0 0.0
        %1308 = vmatprep.subr.mxu0 0.0
        %1309 = vmatpush1.msra.mxu0 0.0
        %1310 = vmatprep.subr.mxu0 0.0
        %1311 = vmatpush1.msra.mxu0 0.0
        %1312 = vmatprep.subr.mxu0 0.0
        %1313 = vmatpush1.msra.mxu0 0.0
        %1314 = vmatprep.subr.mxu0 0.0
        %1315 = vmatpush1.msra.mxu0 0.0
        %1316 = vmatprep.subr.mxu0 0.0
        %1317 = vmatpush1.msra.mxu0 0.0
        %1318 = vmatprep.subr.mxu0 0.0
        %1319 = vmatpush1.msra.mxu0 0.0
        %1320 = vmatprep.subr.mxu0 0.0
        %1321 = vmatpush1.msra.mxu0 0.0
        %1322 = vmatprep.subr.mxu0 0.0
        %1323 = vmatpush1.msra.mxu0 0.0
        %1324 = vmatprep.subr.mxu0 0.0
        %1325 = vmatpush1.msra.mxu0 0.0
        %1326 = vmatprep.subr.mxu0 0.0
        %1327 = vmatpush1.msra.mxu0 0.0
        %1328 = vmatprep.subr.mxu0 0.0
        %1329 = vmatpush1.msra.mxu0 0.0
        %1330 = vmatprep.subr.mxu0 0.0
        %1331 = vmatpush1.msra.mxu0 0.0
        %1332 = vmatprep.subr.mxu0 0.0
        %1333 = vmatpush1.msra.mxu0 0.0
        %1334 = vmatprep.subr.mxu0 0.0
        %1335 = vmatpush1.msra.mxu0 0.0
        %1336 = vmatprep.subr.mxu0 0.0
        %1337 = vmatpush1.msra.mxu0 0.0
        %1338 = vmatprep.subr.mxu0 0.0
        %1339 = vmatpush1.msra.mxu0 0.0
        %1340 = vmatprep.subr.mxu0 0.0
        %1341 = vmatpush1.msra.mxu0 0.0
        %1342 = vmatprep.subr.mxu0 0.0
        %1343 = vmatpush1.msra.mxu0 0.0
        %1344 = vmatprep.subr.mxu0 0.0
        %1345 = vmatpush1.msra.mxu0 0.0
        %1346 = vmatprep.subr.mxu0 0.0
        %1347 = vmatpush1.msra.mxu0 0.0
        %1348 = vmatprep.subr.mxu0 0.0
        %1349 = vmatpush1.msra.mxu0 0.0
        %1350 = vmatprep.mubr.f32.mxu0 0.0
        %1351 = vmatmul.mubr.f32.gmra.mrb[0].mxu0 %v1284
        %v1352 = vpop.f32.mrb[0].mxu0
        %v1353 = vadd.f32 %v1281, %v1352
        %v1354 = vpop.f32.mrb[0].mxu0
        %1355 = vdwg.mxu0
        %1356 = vst.msk [vmem:[%s325] sm:$0xff] %vm338, %v1353
        %s1357 = sand.u32 %s154, 1
        %s1358 = scalar_lea.sflag [#allocation4], %s1357
        %s1359 = sand.u32 %s154, 1
        %s1360 = smul.addr %s1359, 8
        %s1361 = scalar_lea.vmem [#allocation10], %s1360
        // Predicated region
        $region57: #{attention_layer.1} parent=39 // pred_check
          %p1362 = pneg %p164
        $region58: #{attention_layer.1} parent=39 // pred_check_branch
          %1364 = sbr.rel (%p1362) target = $region60
        $region59: #{attention_layer.1} parent=39 // pred_region
          %s1366 = ssub.s32 128, 128
          %1367 = vsyncadd %s1358, %s1366
          %s1368 = smul.addr %s26, 128
          %s1369 = scalar_lea.hbm %s5, %s1368
          %s1371 = sshll.u32 %s1361, 4
          %s1372 = int_to_ptr.vmem [resolvable:$true] %s1371
          %1374 = dma.vmem_to_hbm [thread:$0]  %s1372, 128, %s1369, %s1358
        $region60: #{attention_layer.1} parent=39 // pred_fallthru
          _
      $region40: #{attention_layer.1} parent=5 // pred_fallthru
        _
      %p1375 = scmp.le.s32.totalorder 2, %s21
      // Predicated region
      $region61: #{attention_layer.1} parent=5 // pred_check
        %p1376 = pneg %p1375
      $region62: #{attention_layer.1} parent=5 // pred_check_branch
        %1378 = sbr.rel (%p1376) target = $region64
      $region63: #{attention_layer.1} parent=5 // pred_region
        %s1379 = ssub.s32 %s21, 2
        // Predicated region
        $region65: #{attention_layer.1} parent=63 // pred_check
          %p1380 = pneg %p170
        $region66: #{attention_layer.1} parent=63 // pred_check_branch
          %1382 = sbr.rel (%p1380) target = $region68
        $region67: #{attention_layer.1} parent=63 // pred_region
          %s1383 = sand.u32 %s155, 1
          %s1384 = scalar_lea.sflag [#allocation4], %s1383
          %s1385 = sand.u32 %s155, 1
          %s1386 = smul.addr %s1385, 8
          %s1387 = scalar_lea.vmem [#allocation10], %s1386
          %1388 = dma.done %s1384, 128
        $region68: #{attention_layer.1} parent=63 // pred_fallthru
          _
      $region64: #{attention_layer.1} parent=5 // pred_fallthru
        _
    $region6: #{attention_layer.1} parent=1 // loop_footer
      %s25 = sadd.s32 1, %s21
    $region7: #{attention_layer.1} parent=1 // loop_footer_branch
      %20 = sbr.rel target = $region3
    $region8: #{attention_layer.1} parent=1 // loop_exit
      _
    %1389 = vsyncpa [#allocation3], 1
    %s1390 = scalar_lea.sflag [#allocation3], 1
    %1391 = vsyncpa %s1390, 1
    %1392 = vsyncpa [#allocation6], 1
    %s1393 = scalar_lea.sflag [#allocation6], 1
    %1394 = vsyncpa %s1393, 1
    %1395 = vsyncpa [#allocation9], 1
    %1396 = vsyncpa [#allocation4], 1
    %s1397 = scalar_lea.sflag [#allocation4], 1
    %1398 = vsyncpa %s1397, 1

</llo_original>
